<compile_context>
chip_gen: v7x
topology: tpu7x:2x2x1
jax: 0.10.0
libtpu: 0.0.40
codegen_flags: <defaults>
</compile_context>

<pallas_src>
import functools
import math

import numpy as np
import jax
import jax.numpy as jnp
from jax.experimental import pallas as pl
from jax.experimental.pallas import tpu as pltpu

VMEM = pl.BlockSpec(memory_space=pltpu.MemorySpace.VMEM)


# ------------------------------ Pallas kernels -------------------------------

def _embed_kernel(x_ref, w_ref, o_ref):
    # TokenEmbedding: Conv1d(c_in, d_model, k=3, circular padding, bias=False),
    # lowered to ONE (B*L, 3C) x (3C, D) MXU matmul with bf16 operands.
    x = x_ref[...]                                        # (B, L, C) f32
    B, L, C = x.shape
    xm1 = jnp.concatenate([x[:, L - 1:L, :], x[:, :L - 1, :]], axis=1)   # x[t-1]
    xp1 = jnp.concatenate([x[:, 1:, :], x[:, 0:1, :]], axis=1)           # x[t+1]
    xu = jnp.concatenate([xm1, x, xp1], axis=2).reshape(B * L, 3 * C)
    y = jnp.dot(xu.astype(jnp.bfloat16), w_ref[...],
                preferred_element_type=jnp.float32)       # f32 accumulation
    o_ref[...] = y.reshape(B, L, -1)


def _qkv_kernel(x_ref, w_ref, b_ref, q_ref, k_ref, v_ref):
    # Fused query/key/value projection: one (B*L, D) x (D, 3D) bf16 matmul with
    # f32 accumulation; q/k/v written as three separate outputs (no XLA slices).
    B, L, D = x_ref.shape
    x = x_ref[...].reshape(B * L, D).astype(jnp.bfloat16)
    qkv = jnp.dot(x, w_ref[...], preferred_element_type=jnp.float32) + b_ref[...]
    q_ref[...] = qkv[:, :D]
    k_ref[...] = qkv[:, D:2 * D]
    v_ref[...] = qkv[:, 2 * D:]


def _encoder_body_kernel(x_ref, v_ref, wagg_ref, ma_ref, tin_ref,
                         wo_ref, bo_ref, w1_ref, w2_ref, lng_ref, lnb_ref,
                         ox_ref, ot_ref, *, apply_ln):
    B, L, D = x_ref.shape

    # --- AutoCorrelation inference time-delay aggregation as a batched matmul:
    # agg[b] = W_agg[b] @ v[b].  W_agg bakes the softmaxed top-k delay weights
    # (built in JAX next to the FFT/top-k), so no dynamic slices / v scratch.
    agg = jnp.einsum("blk,bkd->bld", wagg_ref[...], v_ref[...],
                     preferred_element_type=jnp.float32)

    # --- output projection + residual on the flattened (B*L, D) layout so the
    # MXU sees a taller M dimension.
    new_x = (jnp.dot(agg.reshape(B * L, D).astype(jnp.bfloat16), wo_ref[...],
                     preferred_element_type=jnp.float32) + bo_ref[...])
    xs = (x_ref[...].reshape(B * L, D) + new_x).reshape(B, L, D)

    # --- series_decomp 1: moving average (AvgPool1d k, stride 1, replicate
    # padding) expressed as one banded (L, L) matmul, batched over B.
    ma_b = jnp.broadcast_to(ma_ref[...], (B, L, L))
    trend1 = jnp.einsum("blk,bkd->bld", ma_b, xs,
                        preferred_element_type=jnp.float32)
    res1 = xs - trend1

    # --- FFN: conv1 (k=1, no bias) -> relu -> conv2 (k=1, no bias) ------------
    r1 = res1.reshape(B * L, D).astype(jnp.bfloat16)
    h = jnp.maximum(jnp.dot(r1, w1_ref[...],
                            preferred_element_type=jnp.float32), 0.0)
    y = jnp.dot(h.astype(jnp.bfloat16), w2_ref[...],
                preferred_element_type=jnp.float32)

    # --- series_decomp 2 -------------------------------------------------------
    xy = res1 + y.reshape(B, L, D)
    trend2 = jnp.einsum("blk,bkd->bld", ma_b, xy,
                        preferred_element_type=jnp.float32)
    res2 = xy - trend2

    xout = res2
    if apply_ln:
        # my_Layernorm folded into the last layer: LayerNorm over D, then
        # subtract the per-sample mean over L.
        mu = jnp.mean(xout, axis=-1, keepdims=True)
        var = jnp.mean((xout - mu) ** 2, axis=-1, keepdims=True)
        xh = (xout - mu) * jax.lax.rsqrt(var + 1e-5) * lng_ref[...] + lnb_ref[...]
        xout = xh - jnp.mean(xh, axis=1, keepdims=True)

    ox_ref[...] = xout
    ot_ref[...] = tin_ref[...] + trend1 + trend2          # accumulate trend in-kernel


# ------------------------------ Pallas wrappers -------------------------------

def token_embedding(x_enc, emb_w, d_model):
    B, L, _ = x_enc.shape
    # TODO(synk): row-tile with a 'parallel' grid for realistic B*L (v7x dual TC
    # + DMA pipelining); at B*L=32 a single un-gridded call is cheapest.
    return pl.pallas_call(
        _embed_kernel,
        out_shape=jax.ShapeDtypeStruct((B, L, d_model), jnp.float32),
        in_specs=[VMEM, VMEM],
        out_specs=VMEM,
    )(x_enc, emb_w)


def qkv_projection(x, wqkv, bqkv):
    B, L, D = x.shape
    return pl.pallas_call(
        _qkv_kernel,
        out_shape=(jax.ShapeDtypeStruct((B * L, D), jnp.float32),
                   jax.ShapeDtypeStruct((B * L, D), jnp.float32),
                   jax.ShapeDtypeStruct((B * L, D), jnp.float32)),
        in_specs=[VMEM, VMEM, VMEM],
        out_specs=(VMEM, VMEM, VMEM),
    )(x, wqkv, bqkv)


def fused_encoder_body(x, v, w_agg, ma, trend_in, lp, ln_g, ln_b, apply_ln):
    B, L, D = x.shape
    kernel = functools.partial(_encoder_body_kernel, apply_ln=apply_ln)
    # Whole batch per invocation (grid=()): avoids per-batch grid-step overhead
    # and feeds the MXU B*L rows at once.
    return pl.pallas_call(
        kernel,
        out_shape=(jax.ShapeDtypeStruct((B, L, D), jnp.float32),
                   jax.ShapeDtypeStruct((B, L, D), jnp.float32)),
        in_specs=[VMEM] * 11,
        out_specs=(VMEM, VMEM),
    )(x, v, w_agg, ma, trend_in,
      lp["wo"], lp["bo"], lp["w1"], lp["w2"], ln_g, ln_b)


# --------------------------- encoder layer (JAX glue) --------------------------

def encoder_layer(x, trend, lp, cfg, ma, ln_g, ln_b, apply_ln):
    B, L, D = x.shape
    H = cfg["n_heads"]
    E = D // H

    q, k, v = qkv_projection(x, lp["wqkv"], lp["bqkv"])     # each (B*L, D)
    q = q.reshape(B, L, H, E)
    k = k.reshape(B, L, H, E)
    v = v.reshape(B, L, D)

    # TODO(synk): FFT-based period correlation + top-k delay selection has no
    # Pallas equivalent; kept in plain JAX (everything around it is Pallas).
    q_fft = jnp.fft.rfft(q, axis=1)
    k_fft = jnp.fft.rfft(k, axis=1)
    corr = jnp.fft.irfft(q_fft * jnp.conj(k_fft), n=L, axis=1)   # (B, L, H, E)

    top_k = int(cfg["factor"] * math.log(L))
    mean_value = jnp.mean(corr, axis=(2, 3))                     # (B, L)
    weights, delay = jax.lax.top_k(mean_value, top_k)            # (B, top_k)
    tmp_corr = jax.nn.softmax(weights, axis=-1)

    # Bake the softmaxed top-k delay weights into a per-batch (L, L) matrix:
    # W_agg[b, t, j] = sum_i tmp_corr[b, i] * [j == (t + delay[b, i]) % L], so
    # the in-kernel aggregation is one batched MXU matmul.
    t_idx = jnp.arange(L, dtype=jnp.int32)
    gather_idx = (t_idx[None, :, None] + delay[:, None, :]) % L  # (B, L, top_k)
    w_agg = jnp.sum(jax.nn.one_hot(gather_idx, L, dtype=jnp.float32)
                    * tmp_corr[:, None, :, None], axis=2)        # (B, L, L)

    return fused_encoder_body(x, v, w_agg, ma, trend, lp, ln_g, ln_b, apply_ln)


# -------------------------------- Model forward --------------------------------

def model_forward(x_enc, params, cfg):
    x = token_embedding(x_enc, params["emb_w"], cfg["d_model"])
    trend = jnp.zeros_like(x)
    n_layers = len(params["layers"])
    for li, lp in enumerate(params["layers"]):
        # my_Layernorm is folded into the last layer's fused kernel (apply_ln).
        x, trend = encoder_layer(x, trend, lp, cfg, params["ma"],
                                 params["ln_g"], params["ln_b"],
                                 apply_ln=(li == n_layers - 1))
    return x, trend


# ----------------------------------- Params ------------------------------------

def moving_avg_matrix(L, k):
    # series_decomp moving average (replicate padding, stride 1) as a banded
    # (L, L) matrix: trend[t] = (1/k) * sum_j x[clip(t + j - (k-1)//2, 0, L-1)].
    f = (k - 1) // 2
    A = np.zeros((L, L), np.float32)
    for t in range(L):
        for j in range(k):
            m = min(max(t + j - f, 0), L - 1)
            A[t, m] += 1.0 / k
    return jnp.asarray(A)


def init_params(key, cfg):
    enc_in, d_model, d_ff, e_layers = (cfg["enc_in"], cfg["d_model"],
                                       cfg["d_ff"], cfg["e_layers"])

    def nrm(k, shape, scale=0.05, dtype=jnp.bfloat16):
        return (scale * jax.random.normal(k, shape, dtype=jnp.float32)).astype(dtype)

    keys = jax.random.split(key, 1 + e_layers)
    params = {
        # TODO(synk): if importing PyTorch Conv1d weights (d_model, c_in, 3), the
        # (3*enc_in, d_model) flattening order ([tap-1 | tap0 | tap+1] x enc_in)
        # must be verified against the torch layout.
        "emb_w": nrm(keys[0], (3 * enc_in, d_model)),                 # bf16
        "ln_g": jnp.ones((1, d_model), jnp.float32),
        "ln_b": jnp.zeros((1, d_model), jnp.float32),
        "ma": moving_avg_matrix(cfg["seq_len"], cfg["moving_avg"]),   # f32 (L, L)
        "layers": [],
    }
    for l in range(e_layers):
        lk = jax.random.split(keys[1 + l], 6)
        params["layers"].append({
            "wqkv": nrm(lk[0], (d_model, 3 * d_model)),               # bf16 [wq|wk|wv]
            "bqkv": nrm(lk[1], (1, 3 * d_model), dtype=jnp.float32),
            "wo": nrm(lk[2], (d_model, d_model)),                     # bf16
            "bo": nrm(lk[3], (1, d_model), dtype=jnp.float32),
            "w1": nrm(lk[4], (d_model, d_ff)),                        # bf16, conv1 k=1
            "w2": nrm(lk[5], (d_ff, d_model)),                        # bf16, conv2 k=1
        })
    return params


if __name__ == "__main__":
    cfg = dict(seq_len=16, label_len=8, pred_len=8, enc_in=4, d_model=32,
               n_heads=4, d_ff=64, e_layers=2, moving_avg=5, factor=1,
               dropout=0.0, activation="relu", output_attention=False)
    assert cfg["moving_avg"] % 2 == 1

    key = jax.random.PRNGKey(0)
    kp, kx = jax.random.split(key)
    params = init_params(kp, cfg)

    B = 2
    x_enc = jax.random.normal(kx, (B, cfg["seq_len"], cfg["enc_in"]), dtype=jnp.float32)

    fwd = jax.jit(lambda x: model_forward(x, params, cfg))
    enc_s, enc_t = fwd(x_enc)
    jax.block_until_ready((enc_s, enc_t))

    assert enc_s.shape == (B, cfg["seq_len"], cfg["d_model"])
    assert enc_t.shape == (B, cfg["seq_len"], cfg["d_model"])
    assert jnp.all(jnp.isfinite(enc_s)) and jnp.all(jnp.isfinite(enc_t))
    print("KERNEL_OK")
</pallas_src>

<mosaic_0001>
module attributes {stable_mosaic.version = 11 : i64} {
  func.func @_qkv_kernel(%arg0: memref<2x16x32xf32, #tpu.memory_space<vmem>>, %arg1: memref<32x96xbf16, #tpu.memory_space<vmem>>, %arg2: memref<1x96xf32, #tpu.memory_space<vmem>>, %arg3: memref<32x32xf32, #tpu.memory_space<vmem>>, %arg4: memref<32x32xf32, #tpu.memory_space<vmem>>, %arg5: memref<32x32xf32, #tpu.memory_space<vmem>>) attributes {dimension_semantics = [], scalar_prefetch = 0 : i64, scratch_operands = 0 : i64, tpu.core_type = #tpu.core_type<tc>} {
    %c0 = arith.constant 0 : index
    %c0_0 = arith.constant 0 : index
    %c0_1 = arith.constant 0 : index
    %0 = vector.load %arg0[%c0, %c0_0, %c0_1] : memref<2x16x32xf32, #tpu.memory_space<vmem>>, vector<2x16x32xf32>
    %1 = vector.shape_cast %0 : vector<2x16x32xf32> to vector<32x32xf32>
    %2 = arith.truncf %1 : vector<32x32xf32> to vector<32x32xbf16>
    %c0_2 = arith.constant 0 : index
    %c0_3 = arith.constant 0 : index
    %3 = vector.load %arg1[%c0_2, %c0_3] : memref<32x96xbf16, #tpu.memory_space<vmem>>, vector<32x96xbf16>
    %cst = arith.constant dense<0.000000e+00> : vector<32x96xf32>
    %4 = tpu.matmul %2, %3, %cst {dimension_numbers = #tpu.dot_dimension_numbers<[1], [0], [0], [1], [0, 0, 1, 1], [], []>} : vector<32x32xbf16>, vector<32x96xbf16>, vector<32x96xf32> -> vector<32x96xf32>
    %c0_4 = arith.constant 0 : index
    %c0_5 = arith.constant 0 : index
    %5 = vector.load %arg2[%c0_4, %c0_5] : memref<1x96xf32, #tpu.memory_space<vmem>>, vector<1x96xf32>
    %6 = vector.broadcast %5 : vector<1x96xf32> to vector<32x96xf32>
    %7 = arith.addf %4, %6 : vector<32x96xf32>
    %8 = vector.extract_strided_slice %7 {offsets = [0, 0], sizes = [32, 32], strides = [1, 1]} : vector<32x96xf32> to vector<32x32xf32>
    %c0_6 = arith.constant 0 : index
    %c0_7 = arith.constant 0 : index
    %9 = vector.load %arg3[%c0_6, %c0_7] : memref<32x32xf32, #tpu.memory_space<vmem>>, vector<32x32xf32>
    tpu.vector_store %arg3[%c0_6, %c0_7], %8 {strides = array<i32>} : memref<32x32xf32, #tpu.memory_space<vmem>>, vector<32x32xf32>,
    %10 = vector.extract_strided_slice %7 {offsets = [0, 32], sizes = [32, 32], strides = [1, 1]} : vector<32x96xf32> to vector<32x32xf32>
    %c0_8 = arith.constant 0 : index
    %c0_9 = arith.constant 0 : index
    %11 = vector.load %arg4[%c0_8, %c0_9] : memref<32x32xf32, #tpu.memory_space<vmem>>, vector<32x32xf32>
    tpu.vector_store %arg4[%c0_8, %c0_9], %10 {strides = array<i32>} : memref<32x32xf32, #tpu.memory_space<vmem>>, vector<32x32xf32>,
    %12 = vector.extract_strided_slice %7 {offsets = [0, 64], sizes = [32, 32], strides = [1, 1]} : vector<32x96xf32> to vector<32x32xf32>
    %c0_10 = arith.constant 0 : index
    %c0_11 = arith.constant 0 : index
    %13 = vector.load %arg5[%c0_10, %c0_11] : memref<32x32xf32, #tpu.memory_space<vmem>>, vector<32x32xf32>
    tpu.vector_store %arg5[%c0_10, %c0_11], %12 {strides = array<i32>} : memref<32x32xf32, #tpu.memory_space<vmem>>, vector<32x32xf32>,
    return
  }
}

module attributes {stable_mosaic.version = 11 : i64} {
  func.func @_embed_kernel(%arg0: memref<2x16x4xf32, #tpu.memory_space<vmem>>, %arg1: memref<12x32xbf16, #tpu.memory_space<vmem>>, %arg2: memref<2x16x32xf32, #tpu.memory_space<vmem>>) attributes {dimension_semantics = [], scalar_prefetch = 0 : i64, scratch_operands = 0 : i64, tpu.core_type = #tpu.core_type<tc>} {
    %c0 = arith.constant 0 : index
    %c0_0 = arith.constant 0 : index
    %c0_1 = arith.constant 0 : index
    %0 = vector.load %arg0[%c0, %c0_0, %c0_1] : memref<2x16x4xf32, #tpu.memory_space<vmem>>, vector<2x16x4xf32>
    %1 = vector.extract_strided_slice %0 {offsets = [0, 15, 0], sizes = [2, 1, 4], strides = [1, 1, 1]} : vector<2x16x4xf32> to vector<2x1x4xf32>
    %2 = vector.extract_strided_slice %0 {offsets = [0, 0, 0], sizes = [2, 15, 4], strides = [1, 1, 1]} : vector<2x16x4xf32> to vector<2x15x4xf32>
    %3 = tpu.concatenate %1, %2 in 1 : vector<2x1x4xf32>, vector<2x15x4xf32> -> vector<2x16x4xf32>
    %4 = vector.extract_strided_slice %0 {offsets = [0, 1, 0], sizes = [2, 15, 4], strides = [1, 1, 1]} : vector<2x16x4xf32> to vector<2x15x4xf32>
    %5 = vector.extract_strided_slice %0 {offsets = [0, 0, 0], sizes = [2, 1, 4], strides = [1, 1, 1]} : vector<2x16x4xf32> to vector<2x1x4xf32>
    %6 = tpu.concatenate %4, %5 in 1 : vector<2x15x4xf32>, vector<2x1x4xf32> -> vector<2x16x4xf32>
    %7 = tpu.concatenate %3, %0, %6 in 2 : vector<2x16x4xf32>, vector<2x16x4xf32>, vector<2x16x4xf32> -> vector<2x16x12xf32>
    %8 = vector.shape_cast %7 : vector<2x16x12xf32> to vector<32x12xf32>
    %9 = arith.truncf %8 : vector<32x12xf32> to vector<32x12xbf16>
    %c0_2 = arith.constant 0 : index
    %c0_3 = arith.constant 0 : index
    %10 = vector.load %arg1[%c0_2, %c0_3] : memref<12x32xbf16, #tpu.memory_space<vmem>>, vector<12x32xbf16>
    %cst = arith.constant dense<0.000000e+00> : vector<32x32xf32>
    %11 = tpu.matmul %9, %10, %cst {dimension_numbers = #tpu.dot_dimension_numbers<[1], [0], [0], [1], [0, 0, 1, 1], [], []>} : vector<32x12xbf16>, vector<12x32xbf16>, vector<32x32xf32> -> vector<32x32xf32>
    %12 = vector.shape_cast %11 : vector<32x32xf32> to vector<2x16x32xf32>
    %c0_4 = arith.constant 0 : index
    %c0_5 = arith.constant 0 : index
    %c0_6 = arith.constant 0 : index
    %13 = vector.load %arg2[%c0_4, %c0_5, %c0_6] : memref<2x16x32xf32, #tpu.memory_space<vmem>>, vector<2x16x32xf32>
    tpu.vector_store %arg2[%c0_4, %c0_5, %c0_6], %12 {strides = array<i32>} : memref<2x16x32xf32, #tpu.memory_space<vmem>>, vector<2x16x32xf32>,
    return
  }
}

module attributes {stable_mosaic.version = 11 : i64} {
  func.func @_encoder_body_kernel(%arg0: memref<2x16x32xf32, #tpu.memory_space<vmem>>, %arg1: memref<2x16x32xf32, #tpu.memory_space<vmem>>, %arg2: memref<2x16x16xf32, #tpu.memory_space<vmem>>, %arg3: memref<16x16xf32, #tpu.memory_space<vmem>>, %arg4: memref<2x16x32xf32, #tpu.memory_space<vmem>>, %arg5: memref<32x32xbf16, #tpu.memory_space<vmem>>, %arg6: memref<1x32xf32, #tpu.memory_space<vmem>>, %arg7: memref<32x64xbf16, #tpu.memory_space<vmem>>, %arg8: memref<64x32xbf16, #tpu.memory_space<vmem>>, %arg9: memref<1x32xf32, #tpu.memory_space<vmem>>, %arg10: memref<1x32xf32, #tpu.memory_space<vmem>>, %arg11: memref<2x16x32xf32, #tpu.memory_space<vmem>>, %arg12: memref<2x16x32xf32, #tpu.memory_space<vmem>>) attributes {dimension_semantics = [], scalar_prefetch = 0 : i64, scratch_operands = 0 : i64, tpu.core_type = #tpu.core_type<tc>} {
    %c0 = arith.constant 0 : index
    %c0_0 = arith.constant 0 : index
    %c0_1 = arith.constant 0 : index
    %0 = vector.load %arg2[%c0, %c0_0, %c0_1] : memref<2x16x16xf32, #tpu.memory_space<vmem>>, vector<2x16x16xf32>
    %c0_2 = arith.constant 0 : index
    %c0_3 = arith.constant 0 : index
    %c0_4 = arith.constant 0 : index
    %1 = vector.load %arg1[%c0_2, %c0_3, %c0_4] : memref<2x16x32xf32, #tpu.memory_space<vmem>>, vector<2x16x32xf32>
    "tpu.trace_start"() <{level = 10 : i32, message = "blk,bkd->bld"}> : () -> ()
    %cst = arith.constant dense<0.000000e+00> : vector<2x16x32xf32>
    %2 = tpu.matmul %0, %1, %cst {dimension_numbers = #tpu.dot_dimension_numbers<[2], [1], [1], [2], [0, 0, 0, 1, 1, 2], [0], [0]>} : vector<2x16x16xf32>, vector<2x16x32xf32>, vector<2x16x32xf32> -> vector<2x16x32xf32>
    "tpu.trace_stop"() : () -> ()
    %3 = vector.shape_cast %2 : vector<2x16x32xf32> to vector<32x32xf32>
    %4 = arith.truncf %3 : vector<32x32xf32> to vector<32x32xbf16>
    %c0_5 = arith.constant 0 : index
    %c0_6 = arith.constant 0 : index
    %5 = vector.load %arg5[%c0_5, %c0_6] : memref<32x32xbf16, #tpu.memory_space<vmem>>, vector<32x32xbf16>
    %cst_7 = arith.constant dense<0.000000e+00> : vector<32x32xf32>
    %6 = tpu.matmul %4, %5, %cst_7 {dimension_numbers = #tpu.dot_dimension_numbers<[1], [0], [0], [1], [0, 0, 1, 1], [], []>} : vector<32x32xbf16>, vector<32x32xbf16>, vector<32x32xf32> -> vector<32x32xf32>
    %c0_8 = arith.constant 0 : index
    %c0_9 = arith.constant 0 : index
    %7 = vector.load %arg6[%c0_8, %c0_9] : memref<1x32xf32, #tpu.memory_space<vmem>>, vector<1x32xf32>
    %8 = vector.broadcast %7 : vector<1x32xf32> to vector<32x32xf32>
    %9 = arith.addf %6, %8 : vector<32x32xf32>
    %c0_10 = arith.constant 0 : index
    %c0_11 = arith.constant 0 : index
    %c0_12 = arith.constant 0 : index
    %10 = vector.load %arg0[%c0_10, %c0_11, %c0_12] : memref<2x16x32xf32, #tpu.memory_space<vmem>>, vector<2x16x32xf32>
    %11 = vector.shape_cast %10 : vector<2x16x32xf32> to vector<32x32xf32>
    %12 = arith.addf %11, %9 : vector<32x32xf32>
    %13 = vector.shape_cast %12 : vector<32x32xf32> to vector<2x16x32xf32>
    %c0_13 = arith.constant 0 : index
    %c0_14 = arith.constant 0 : index
    %14 = vector.load %arg3[%c0_13, %c0_14] : memref<16x16xf32, #tpu.memory_space<vmem>>, vector<16x16xf32>
    %15 = vector.shape_cast %14 : vector<16x16xf32> to vector<1x16x16xf32>
    %16 = vector.broadcast %15 : vector<1x16x16xf32> to vector<2x16x16xf32>
    "tpu.trace_start"() <{level = 10 : i32, message = "blk,bkd->bld"}> : () -> ()
    %cst_15 = arith.constant dense<0.000000e+00> : vector<2x16x32xf32>
    %17 = tpu.matmul %16, %13, %cst_15 {dimension_numbers = #tpu.dot_dimension_numbers<[2], [1], [1], [2], [0, 0, 0, 1, 1, 2], [0], [0]>} : vector<2x16x16xf32>, vector<2x16x32xf32>, vector<2x16x32xf32> -> vector<2x16x32xf32>
    "tpu.trace_stop"() : () -> ()
    %18 = arith.subf %13, %17 : vector<2x16x32xf32>
    %19 = vector.shape_cast %18 : vector<2x16x32xf32> to vector<32x32xf32>
    %20 = arith.truncf %19 : vector<32x32xf32> to vector<32x32xbf16>
    %c0_16 = arith.constant 0 : index
    %c0_17 = arith.constant 0 : index
    %21 = vector.load %arg7[%c0_16, %c0_17] : memref<32x64xbf16, #tpu.memory_space<vmem>>, vector<32x64xbf16>
    %cst_18 = arith.constant dense<0.000000e+00> : vector<32x64xf32>
    %22 = tpu.matmul %20, %21, %cst_18 {dimension_numbers = #tpu.dot_dimension_numbers<[1], [0], [0], [1], [0, 0, 1, 1], [], []>} : vector<32x32xbf16>, vector<32x64xbf16>, vector<32x64xf32> -> vector<32x64xf32>
    %cst_19 = arith.constant 0.000000e+00 : f32
    %23 = vector.broadcast %cst_19 : f32 to vector<32x64xf32>
    %24 = arith.maximumf %22, %23 : vector<32x64xf32>
    %25 = arith.truncf %24 : vector<32x64xf32> to vector<32x64xbf16>
    %c0_20 = arith.constant 0 : index
    %c0_21 = arith.constant 0 : index
    %26 = vector.load %arg8[%c0_20, %c0_21] : memref<64x32xbf16, #tpu.memory_space<vmem>>, vector<64x32xbf16>
    %cst_22 = arith.constant dense<0.000000e+00> : vector<32x32xf32>
    %27 = tpu.matmul %25, %26, %cst_22 {dimension_numbers = #tpu.dot_dimension_numbers<[1], [0], [0], [1], [0, 0, 1, 1], [], []>} : vector<32x64xbf16>, vector<64x32xbf16>, vector<32x32xf32> -> vector<32x32xf32>
    %28 = vector.shape_cast %27 : vector<32x32xf32> to vector<2x16x32xf32>
    %29 = arith.addf %18, %28 : vector<2x16x32xf32>
    "tpu.trace_start"() <{level = 10 : i32, message = "blk,bkd->bld"}> : () -> ()
    %cst_23 = arith.constant dense<0.000000e+00> : vector<2x16x32xf32>
    %30 = tpu.matmul %16, %29, %cst_23 {dimension_numbers = #tpu.dot_dimension_numbers<[2], [1], [1], [2], [0, 0, 0, 1, 1, 2], [0], [0]>} : vector<2x16x16xf32>, vector<2x16x32xf32>, vector<2x16x32xf32> -> vector<2x16x32xf32>
    "tpu.trace_stop"() : () -> ()
    %31 = arith.subf %29, %30 : vector<2x16x32xf32>
    %cst_24 = arith.constant dense<0.000000e+00> : vector<2x16xf32>
    %32 = vector.multi_reduction <add>, %31, %cst_24 [2] : vector<2x16x32xf32> to vector<2x16xf32>
    %33 = vector.shape_cast %32 : vector<2x16xf32> to vector<2x16x1xf32>
    %cst_25 = arith.constant 3.200000e+01 : f32
    %34 = vector.broadcast %cst_25 : f32 to vector<2x16x1xf32>
    %35 = arith.divf %33, %34 : vector<2x16x1xf32>
    %36 = vector.broadcast %35 : vector<2x16x1xf32> to vector<2x16x32xf32>
    %37 = arith.subf %31, %36 : vector<2x16x32xf32>
    %38 = arith.mulf %37, %37 : vector<2x16x32xf32>
    %cst_26 = arith.constant dense<0.000000e+00> : vector<2x16xf32>
    %39 = vector.multi_reduction <add>, %38, %cst_26 [2] : vector<2x16x32xf32> to vector<2x16xf32>
    %40 = vector.shape_cast %39 : vector<2x16xf32> to vector<2x16x1xf32>
    %cst_27 = arith.constant 3.200000e+01 : f32
    %41 = vector.broadcast %cst_27 : f32 to vector<2x16x1xf32>
    %42 = arith.divf %40, %41 : vector<2x16x1xf32>
    %43 = vector.broadcast %35 : vector<2x16x1xf32> to vector<2x16x32xf32>
    %44 = arith.subf %31, %43 : vector<2x16x32xf32>
    %cst_28 = arith.constant 9.99999974E-6 : f32
    %45 = vector.broadcast %cst_28 : f32 to vector<2x16x1xf32>
    %46 = arith.addf %42, %45 : vector<2x16x1xf32>
    %47 = math.rsqrt %46 : vector<2x16x1xf32>
    %48 = vector.broadcast %47 : vector<2x16x1xf32> to vector<2x16x32xf32>
    %49 = arith.mulf %44, %48 : vector<2x16x32xf32>
    %c0_29 = arith.constant 0 : index
    %c0_30 = arith.constant 0 : index
    %50 = vector.load %arg9[%c0_29, %c0_30] : memref<1x32xf32, #tpu.memory_space<vmem>>, vector<1x32xf32>
    %51 = vector.shape_cast %50 : vector<1x32xf32> to vector<1x1x32xf32>
    %52 = vector.broadcast %51 : vector<1x1x32xf32> to vector<2x16x32xf32>
    %53 = arith.mulf %49, %52 : vector<2x16x32xf32>
    %c0_31 = arith.constant 0 : index
    %c0_32 = arith.constant 0 : index
    %54 = vector.load %arg10[%c0_31, %c0_32] : memref<1x32xf32, #tpu.memory_space<vmem>>, vector<1x32xf32>
    %55 = vector.shape_cast %54 : vector<1x32xf32> to vector<1x1x32xf32>
    %56 = vector.broadcast %55 : vector<1x1x32xf32> to vector<2x16x32xf32>
    %57 = arith.addf %53, %56 : vector<2x16x32xf32>
    %cst_33 = arith.constant dense<0.000000e+00> : vector<2x32xf32>
    %58 = vector.multi_reduction <add>, %57, %cst_33 [1] : vector<2x16x32xf32> to vector<2x32xf32>
    %59 = vector.shape_cast %58 : vector<2x32xf32> to vector<2x1x32xf32>
    %cst_34 = arith.constant 1.600000e+01 : f32
    %60 = vector.broadcast %cst_34 : f32 to vector<2x1x32xf32>
    %61 = arith.divf %59, %60 : vector<2x1x32xf32>
    %62 = vector.broadcast %61 : vector<2x1x32xf32> to vector<2x16x32xf32>
    %63 = arith.subf %57, %62 : vector<2x16x32xf32>
    %c0_35 = arith.constant 0 : index
    %c0_36 = arith.constant 0 : index
    %c0_37 = arith.constant 0 : index
    %64 = vector.load %arg11[%c0_35, %c0_36, %c0_37] : memref<2x16x32xf32, #tpu.memory_space<vmem>>, vector<2x16x32xf32>
    tpu.vector_store %arg11[%c0_35, %c0_36, %c0_37], %63 {strides = array<i32>} : memref<2x16x32xf32, #tpu.memory_space<vmem>>, vector<2x16x32xf32>,
    %c0_38 = arith.constant 0 : index
    %c0_39 = arith.constant 0 : index
    %c0_40 = arith.constant 0 : index
    %65 = vector.load %arg4[%c0_38, %c0_39, %c0_40] : memref<2x16x32xf32, #tpu.memory_space<vmem>>, vector<2x16x32xf32>
    %66 = arith.addf %65, %17 : vector<2x16x32xf32>
    %67 = arith.addf %66, %30 : vector<2x16x32xf32>
    %c0_41 = arith.constant 0 : index
    %c0_42 = arith.constant 0 : index
    %c0_43 = arith.constant 0 : index
    %68 = vector.load %arg12[%c0_41, %c0_42, %c0_43] : memref<2x16x32xf32, #tpu.memory_space<vmem>>, vector<2x16x32xf32>
    tpu.vector_store %arg12[%c0_41, %c0_42, %c0_43], %67 {strides = array<i32>} : memref<2x16x32xf32, #tpu.memory_space<vmem>>, vector<2x16x32xf32>,
    return
  }
}

module attributes {stable_mosaic.version = 11 : i64} {
  func.func @_encoder_body_kernel(%arg0: memref<2x16x32xf32, #tpu.memory_space<vmem>>, %arg1: memref<2x16x32xf32, #tpu.memory_space<vmem>>, %arg2: memref<2x16x16xf32, #tpu.memory_space<vmem>>, %arg3: memref<16x16xf32, #tpu.memory_space<vmem>>, %arg4: memref<2x16x32xf32, #tpu.memory_space<vmem>>, %arg5: memref<32x32xbf16, #tpu.memory_space<vmem>>, %arg6: memref<1x32xf32, #tpu.memory_space<vmem>>, %arg7: memref<32x64xbf16, #tpu.memory_space<vmem>>, %arg8: memref<64x32xbf16, #tpu.memory_space<vmem>>, %arg9: memref<1x32xf32, #tpu.memory_space<vmem>>, %arg10: memref<1x32xf32, #tpu.memory_space<vmem>>, %arg11: memref<2x16x32xf32, #tpu.memory_space<vmem>>, %arg12: memref<2x16x32xf32, #tpu.memory_space<vmem>>) attributes {dimension_semantics = [], scalar_prefetch = 0 : i64, scratch_operands = 0 : i64, tpu.core_type = #tpu.core_type<tc>} {
    %c0 = arith.constant 0 : index
    %c0_0 = arith.constant 0 : index
    %c0_1 = arith.constant 0 : index
    %0 = vector.load %arg2[%c0, %c0_0, %c0_1] : memref<2x16x16xf32, #tpu.memory_space<vmem>>, vector<2x16x16xf32>
    %c0_2 = arith.constant 0 : index
    %c0_3 = arith.constant 0 : index
    %c0_4 = arith.constant 0 : index
    %1 = vector.load %arg1[%c0_2, %c0_3, %c0_4] : memref<2x16x32xf32, #tpu.memory_space<vmem>>, vector<2x16x32xf32>
    "tpu.trace_start"() <{level = 10 : i32, message = "blk,bkd->bld"}> : () -> ()
    %cst = arith.constant dense<0.000000e+00> : vector<2x16x32xf32>
    %2 = tpu.matmul %0, %1, %cst {dimension_numbers = #tpu.dot_dimension_numbers<[2], [1], [1], [2], [0, 0, 0, 1, 1, 2], [0], [0]>} : vector<2x16x16xf32>, vector<2x16x32xf32>, vector<2x16x32xf32> -> vector<2x16x32xf32>
    "tpu.trace_stop"() : () -> ()
    %3 = vector.shape_cast %2 : vector<2x16x32xf32> to vector<32x32xf32>
    %4 = arith.truncf %3 : vector<32x32xf32> to vector<32x32xbf16>
    %c0_5 = arith.constant 0 : index
    %c0_6 = arith.constant 0 : index
    %5 = vector.load %arg5[%c0_5, %c0_6] : memref<32x32xbf16, #tpu.memory_space<vmem>>, vector<32x32xbf16>
    %cst_7 = arith.constant dense<0.000000e+00> : vector<32x32xf32>
    %6 = tpu.matmul %4, %5, %cst_7 {dimension_numbers = #tpu.dot_dimension_numbers<[1], [0], [0], [1], [0, 0, 1, 1], [], []>} : vector<32x32xbf16>, vector<32x32xbf16>, vector<32x32xf32> -> vector<32x32xf32>
    %c0_8 = arith.constant 0 : index
    %c0_9 = arith.constant 0 : index
    %7 = vector.load %arg6[%c0_8, %c0_9] : memref<1x32xf32, #tpu.memory_space<vmem>>, vector<1x32xf32>
    %8 = vector.broadcast %7 : vector<1x32xf32> to vector<32x32xf32>
    %9 = arith.addf %6, %8 : vector<32x32xf32>
    %c0_10 = arith.constant 0 : index
    %c0_11 = arith.constant 0 : index
    %c0_12 = arith.constant 0 : index
    %10 = vector.load %arg0[%c0_10, %c0_11, %c0_12] : memref<2x16x32xf32, #tpu.memory_space<vmem>>, vector<2x16x32xf32>
    %11 = vector.shape_cast %10 : vector<2x16x32xf32> to vector<32x32xf32>
    %12 = arith.addf %11, %9 : vector<32x32xf32>
    %13 = vector.shape_cast %12 : vector<32x32xf32> to vector<2x16x32xf32>
    %c0_13 = arith.constant 0 : index
    %c0_14 = arith.constant 0 : index
    %14 = vector.load %arg3[%c0_13, %c0_14] : memref<16x16xf32, #tpu.memory_space<vmem>>, vector<16x16xf32>
    %15 = vector.shape_cast %14 : vector<16x16xf32> to vector<1x16x16xf32>
    %16 = vector.broadcast %15 : vector<1x16x16xf32> to vector<2x16x16xf32>
    "tpu.trace_start"() <{level = 10 : i32, message = "blk,bkd->bld"}> : () -> ()
    %cst_15 = arith.constant dense<0.000000e+00> : vector<2x16x32xf32>
    %17 = tpu.matmul %16, %13, %cst_15 {dimension_numbers = #tpu.dot_dimension_numbers<[2], [1], [1], [2], [0, 0, 0, 1, 1, 2], [0], [0]>} : vector<2x16x16xf32>, vector<2x16x32xf32>, vector<2x16x32xf32> -> vector<2x16x32xf32>
    "tpu.trace_stop"() : () -> ()
    %18 = arith.subf %13, %17 : vector<2x16x32xf32>
    %19 = vector.shape_cast %18 : vector<2x16x32xf32> to vector<32x32xf32>
    %20 = arith.truncf %19 : vector<32x32xf32> to vector<32x32xbf16>
    %c0_16 = arith.constant 0 : index
    %c0_17 = arith.constant 0 : index
    %21 = vector.load %arg7[%c0_16, %c0_17] : memref<32x64xbf16, #tpu.memory_space<vmem>>, vector<32x64xbf16>
    %cst_18 = arith.constant dense<0.000000e+00> : vector<32x64xf32>
    %22 = tpu.matmul %20, %21, %cst_18 {dimension_numbers = #tpu.dot_dimension_numbers<[1], [0], [0], [1], [0, 0, 1, 1], [], []>} : vector<32x32xbf16>, vector<32x64xbf16>, vector<32x64xf32> -> vector<32x64xf32>
    %cst_19 = arith.constant 0.000000e+00 : f32
    %23 = vector.broadcast %cst_19 : f32 to vector<32x64xf32>
    %24 = arith.maximumf %22, %23 : vector<32x64xf32>
    %25 = arith.truncf %24 : vector<32x64xf32> to vector<32x64xbf16>
    %c0_20 = arith.constant 0 : index
    %c0_21 = arith.constant 0 : index
    %26 = vector.load %arg8[%c0_20, %c0_21] : memref<64x32xbf16, #tpu.memory_space<vmem>>, vector<64x32xbf16>
    %cst_22 = arith.constant dense<0.000000e+00> : vector<32x32xf32>
    %27 = tpu.matmul %25, %26, %cst_22 {dimension_numbers = #tpu.dot_dimension_numbers<[1], [0], [0], [1], [0, 0, 1, 1], [], []>} : vector<32x64xbf16>, vector<64x32xbf16>, vector<32x32xf32> -> vector<32x32xf32>
    %28 = vector.shape_cast %27 : vector<32x32xf32> to vector<2x16x32xf32>
    %29 = arith.addf %18, %28 : vector<2x16x32xf32>
    "tpu.trace_start"() <{level = 10 : i32, message = "blk,bkd->bld"}> : () -> ()
    %cst_23 = arith.constant dense<0.000000e+00> : vector<2x16x32xf32>
    %30 = tpu.matmul %16, %29, %cst_23 {dimension_numbers = #tpu.dot_dimension_numbers<[2], [1], [1], [2], [0, 0, 0, 1, 1, 2], [0], [0]>} : vector<2x16x16xf32>, vector<2x16x32xf32>, vector<2x16x32xf32> -> vector<2x16x32xf32>
    "tpu.trace_stop"() : () -> ()
    %31 = arith.subf %29, %30 : vector<2x16x32xf32>
    %c0_24 = arith.constant 0 : index
    %c0_25 = arith.constant 0 : index
    %c0_26 = arith.constant 0 : index
    %32 = vector.load %arg11[%c0_24, %c0_25, %c0_26] : memref<2x16x32xf32, #tpu.memory_space<vmem>>, vector<2x16x32xf32>
    tpu.vector_store %arg11[%c0_24, %c0_25, %c0_26], %31 {strides = array<i32>} : memref<2x16x32xf32, #tpu.memory_space<vmem>>, vector<2x16x32xf32>,
    %c0_27 = arith.constant 0 : index
    %c0_28 = arith.constant 0 : index
    %c0_29 = arith.constant 0 : index
    %33 = vector.load %arg4[%c0_27, %c0_28, %c0_29] : memref<2x16x32xf32, #tpu.memory_space<vmem>>, vector<2x16x32xf32>
    %34 = arith.addf %33, %17 : vector<2x16x32xf32>
    %35 = arith.addf %34, %30 : vector<2x16x32xf32>
    %c0_30 = arith.constant 0 : index
    %c0_31 = arith.constant 0 : index
    %c0_32 = arith.constant 0 : index
    %36 = vector.load %arg12[%c0_30, %c0_31, %c0_32] : memref<2x16x32xf32, #tpu.memory_space<vmem>>, vector<2x16x32xf32>
    tpu.vector_store %arg12[%c0_30, %c0_31, %c0_32], %35 {strides = array<i32>} : memref<2x16x32xf32, #tpu.memory_space<vmem>>, vector<2x16x32xf32>,
    return
  }
}

</mosaic_0001>

<llo_original>
// kernel: _lambda_.6
$region0: #{_lambda_.6}
  #allocation0 [shape = 'u32[]', space=smem, size = 0x4, offset = 0x4, fixed_abs, tag = 'smem constant byte address 0x4 - core index']
  #allocation1 [shape = 'u32[144,128]{1,0:T(1,128)}', space=vmem, size = 0x12000, scoped, tag = 'internal scratch']
  %s0 = inlined_call_operand.vmem [shape: f32[2,16,32], index: 0, kind: input, shape index: {}]
  %s1 = inlined_call_operand.vmem [shape: bf16[32,96], index: 1, kind: input, shape index: {}]
  %s2 = inlined_call_operand.vmem [shape: f32[1,96], index: 2, kind: input, shape index: {}]
  %s3 = inlined_call_operand.vmem [shape: f32[32,32], index: 3, kind: output, shape index: {0}]
  %s4 = inlined_call_operand.vmem [shape: f32[32,32], index: 4, kind: output, shape index: {1}]
  %s5 = inlined_call_operand.vmem [shape: f32[32,32], index: 5, kind: output, shape index: {2}]
  %6 = xla_tuple %s3, %s4, %s5
  %s7 = sld [smem:[#allocation0]]
  $region38: #{_lambda_.6} parent=0
    _
  %s9 = ssub.s32 1, %s7
  %s10 = scalar_select 0, %s9, %s7
  // Predicated region
  $region2: #{_lambda_.6} parent=0 // pred_check
    _
  $region3: #{_lambda_.6} parent=0 // pred_check_branch
    %12 = sbr.rel (0) target = $region5
  $region4: #{_lambda_.6} parent=0 // pred_region
    _
  $region5: #{_lambda_.6} parent=0 // pred_fallthru
    _
  // Predicated region
  $region6: #{_lambda_.6} parent=0 // pred_check
    _
  $region7: #{_lambda_.6} parent=0 // pred_check_branch
    %14 = sbr.rel (0) target = $region9
  $region8: #{_lambda_.6} parent=0 // pred_region
    _
  $region9: #{_lambda_.6} parent=0 // pred_fallthru
    _
  // Predicated region
  $region10: #{_lambda_.6} parent=0 // pred_check
    _
  $region11: #{_lambda_.6} parent=0 // pred_check_branch
    %16 = sbr.rel (0) target = $region13
  $region12: #{_lambda_.6} parent=0 // pred_region
    _
  $region13: #{_lambda_.6} parent=0 // pred_fallthru
    _
  %v18 = vld [vmem:[%s0] sm:$0xff]
  %v19 = vld [vmem:[%s0 + $0x8] sm:$0xff]
  %v20 = vld [vmem:[%s0 + $0x10] sm:$0xff]
  %v21 = vld [vmem:[%s0 + $0x18] sm:$0xff]
  %v22 = vpack.c.bf16 %v19, %v18
  %v23 = vpack.c.bf16 %v21, %v20
  %v24 = vld [vmem:[%s1] sm:$0xf]
  %v25 = vld [vmem:[%s1 + $0x4] sm:$0xf]
  %v26 = vld [vmem:[%s1 + $0x8] sm:$0xf]
  %v27 = vld [vmem:[%s1 + $0xc] sm:$0xf]
  %v28 = vld [vmem:[%s2] sm:$0x1]
  %v30 = vlaneseq
  %v31 = vshrl.u32 %v30, 7
  %v32 = vsub.s32 0, %v31
  %v33 = vrot.slane %v28, %v32
  %v39 = vunpack.c.l.b16 %v24
  %v40 = vunpack.c.l.b16 %v25
  %v41 = vunpack.c.l.b16 %v26
  %v42 = vunpack.c.l.b16 %v27
  %v43 = vpack.c.b16 %v40, %v39
  %v44 = vpack.c.b16 %v42, %v41
  %vm47 = vcmask 261120
  %v49 = vsel %vm47, %v22, 0
  %v52 = vsel %vm47, %v23, 0
  %54 = vmatprep.subr.bf16.mxu0 0
  %55 = vmatpush1.bf16.msra.mxu0 %v43
  %56 = vmatprep.subr.bf16.mxu0 0
  %57 = vmatpush1.bf16.msra.mxu0 %v44
  %58 = vmatprep.subr.bf16.mxu0 0
  %59 = vmatpush1.bf16.msra.mxu0 0
  %60 = vmatprep.subr.bf16.mxu0 0
  %61 = vmatpush1.bf16.msra.mxu0 0
  %62 = vmatprep.subr.bf16.mxu0 0
  %63 = vmatpush1.bf16.msra.mxu0 0
  %64 = vmatprep.subr.bf16.mxu0 0
  %65 = vmatpush1.bf16.msra.mxu0 0
  %66 = vmatprep.subr.bf16.mxu0 0
  %67 = vmatpush1.bf16.msra.mxu0 0
  %68 = vmatprep.subr.bf16.mxu0 0
  %69 = vmatpush1.bf16.msra.mxu0 0
  %70 = vmatprep.subr.bf16.mxu0 0
  %71 = vmatpush1.bf16.msra.mxu0 0
  %72 = vmatprep.subr.bf16.mxu0 0
  %73 = vmatpush1.bf16.msra.mxu0 0
  %74 = vmatprep.subr.bf16.mxu0 0
  %75 = vmatpush1.bf16.msra.mxu0 0
  %76 = vmatprep.subr.bf16.mxu0 0
  %77 = vmatpush1.bf16.msra.mxu0 0
  %78 = vmatprep.subr.bf16.mxu0 0
  %79 = vmatpush1.bf16.msra.mxu0 0
  %80 = vmatprep.subr.bf16.mxu0 0
  %81 = vmatpush1.bf16.msra.mxu0 0
  %82 = vmatprep.subr.bf16.mxu0 0
  %83 = vmatpush1.bf16.msra.mxu0 0
  %84 = vmatprep.subr.bf16.mxu0 0
  %85 = vmatpush1.bf16.msra.mxu0 0
  %86 = vmatprep.mubr.bf16.mxu0 0
  %87 = vmatmul.mubr.bf16.gmra.mrb[0].mxu0 %v49
  %v88 = vpop.f32.mrb[0].mxu0
  %v89 = vadd.f32 %v33, %v88
  %v90 = vpop.f32.mrb[0].mxu0
  %v91 = vpop.f32.mrb[0].mxu0
  %v92 = vadd.f32 %v33, %v91
  %v93 = vpop.f32.mrb[0].mxu0
  %94 = vmatprep.mubr.bf16.mxu0 0
  %95 = vmatmul.mubr.bf16.gmra.mrb[0].mxu0 %v52
  %v96 = vpop.f32.mrb[0].mxu0
  %v97 = vadd.f32 %v33, %v96
  %v98 = vpop.f32.mrb[0].mxu0
  %v99 = vpop.f32.mrb[0].mxu0
  %v100 = vadd.f32 %v33, %v99
  %v101 = vpop.f32.mrb[0].mxu0
  %102 = vdwg.mxu0
  %103 = vst.msk [vmem:[%s3] sm:$0xff] %vm47, %v89
  %104 = vst.msk [vmem:[%s3 + $0x8] sm:$0xff] %vm47, %v92
  %105 = vst.msk [vmem:[%s3 + $0x10] sm:$0xff] %vm47, %v97
  %106 = vst.msk [vmem:[%s3 + $0x18] sm:$0xff] %vm47, %v100
  %111 = vrot.lane.b32.xlu0 %v89, 96
  %v112 = vpop.permute.xlu0 %111
  %113 = vrot.lane.b32.xlu0 %v92, 96
  %v114 = vpop.permute.xlu0 %113
  %115 = vrot.lane.b32.xlu0 %v97, 96
  %v116 = vpop.permute.xlu0 %115
  %117 = vrot.lane.b32.xlu0 %v100, 96
  %v118 = vpop.permute.xlu0 %117
  %123 = vst.msk [vmem:[%s4] sm:$0xff] %vm47, %v112
  %124 = vst.msk [vmem:[%s4 + $0x8] sm:$0xff] %vm47, %v114
  %125 = vst.msk [vmem:[%s4 + $0x10] sm:$0xff] %vm47, %v116
  %126 = vst.msk [vmem:[%s4 + $0x18] sm:$0xff] %vm47, %v118
  %127 = vrot.lane.b32.xlu0 %v89, 64
  %v128 = vpop.permute.xlu0 %127
  %129 = vrot.lane.b32.xlu0 %v92, 64
  %v130 = vpop.permute.xlu0 %129
  %131 = vrot.lane.b32.xlu0 %v97, 64
  %v132 = vpop.permute.xlu0 %131
  %133 = vrot.lane.b32.xlu0 %v100, 64
  %v134 = vpop.permute.xlu0 %133
  %139 = vst.msk [vmem:[%s5] sm:$0xff] %vm47, %v128
  %140 = vst.msk [vmem:[%s5 + $0x8] sm:$0xff] %vm47, %v130
  %141 = vst.msk [vmem:[%s5 + $0x10] sm:$0xff] %vm47, %v132
  %142 = vst.msk [vmem:[%s5 + $0x18] sm:$0xff] %vm47, %v134
  // Predicated region
  $region14: #{_lambda_.6} parent=0 // pred_check
    _
  $region15: #{_lambda_.6} parent=0 // pred_check_branch
    %144 = sbr.rel (0) target = $region17
  $region16: #{_lambda_.6} parent=0 // pred_region
    _
  $region17: #{_lambda_.6} parent=0 // pred_fallthru
    _
  // Predicated region
  $region18: #{_lambda_.6} parent=0 // pred_check
    _
  $region19: #{_lambda_.6} parent=0 // pred_check_branch
    %146 = sbr.rel (0) target = $region21
  $region20: #{_lambda_.6} parent=0 // pred_region
    _
  $region21: #{_lambda_.6} parent=0 // pred_fallthru
    _
  // Predicated region
  $region22: #{_lambda_.6} parent=0 // pred_check
    _
  $region23: #{_lambda_.6} parent=0 // pred_check_branch
    %148 = sbr.rel (0) target = $region25
  $region24: #{_lambda_.6} parent=0 // pred_region
    _
  $region25: #{_lambda_.6} parent=0 // pred_fallthru
    _
  // Predicated region
  $region26: #{_lambda_.6} parent=0 // pred_check
    _
  $region27: #{_lambda_.6} parent=0 // pred_check_branch
    %150 = sbr.rel (0) target = $region29
  $region28: #{_lambda_.6} parent=0 // pred_region
    _
  $region29: #{_lambda_.6} parent=0 // pred_fallthru
    _
  // Predicated region
  $region30: #{_lambda_.6} parent=0 // pred_check
    _
  $region31: #{_lambda_.6} parent=0 // pred_check_branch
    %152 = sbr.rel (0) target = $region33
  $region32: #{_lambda_.6} parent=0 // pred_region
    _
  $region33: #{_lambda_.6} parent=0 // pred_fallthru
    _
  // Predicated region
  $region34: #{_lambda_.6} parent=0 // pred_check
    _
  $region35: #{_lambda_.6} parent=0 // pred_check_branch
    %154 = sbr.rel (0) target = $region37
  $region36: #{_lambda_.6} parent=0 // pred_region
    _
  $region37: #{_lambda_.6} parent=0 // pred_fallthru
    _

// kernel: _lambda_.5
$region0: #{_lambda_.5}
  #allocation0 [shape = 'u32[]', space=smem, size = 0x4, offset = 0x4, fixed_abs, tag = 'smem constant byte address 0x4 - core index']
  #allocation1 [shape = 'u32[144,128]{1,0:T(1,128)}', space=vmem, size = 0x12000, scoped, tag = 'internal scratch']
  %s0 = inlined_call_operand.vmem [shape: f32[2,16,4], index: 0, kind: input, shape index: {}]
  %s1 = inlined_call_operand.vmem [shape: bf16[12,32], index: 1, kind: input, shape index: {}]
  %s2 = inlined_call_operand.vmem [shape: f32[2,16,32], index: 2, kind: output, shape index: {}]
  %s3 = sld [smem:[#allocation0]]
  $region18: #{_lambda_.5} parent=0
    _
  %s5 = ssub.s32 1, %s3
  %s6 = scalar_select 0, %s5, %s3
  // Predicated region
  $region2: #{_lambda_.5} parent=0 // pred_check
    _
  $region3: #{_lambda_.5} parent=0 // pred_check_branch
    %8 = sbr.rel (0) target = $region5
  $region4: #{_lambda_.5} parent=0 // pred_region
    _
  $region5: #{_lambda_.5} parent=0 // pred_fallthru
    _
  // Predicated region
  $region6: #{_lambda_.5} parent=0 // pred_check
    _
  $region7: #{_lambda_.5} parent=0 // pred_check_branch
    %10 = sbr.rel (0) target = $region9
  $region8: #{_lambda_.5} parent=0 // pred_region
    _
  $region9: #{_lambda_.5} parent=0 // pred_fallthru
    _
  %v12 = vld [vmem:[%s0] sm:$0xff]
  %v13 = vld [vmem:[%s0 + $0x8] sm:$0xff]
  %v14 = vld [vmem:[%s0 + $0x10] sm:$0xff]
  %v15 = vld [vmem:[%s0 + $0x18] sm:$0xff]
  %v18 = vrot.slane %v13, 7
  %v19 = vrot.slane %v15, 7
  %vm24 = vcmask 1040384
  %v25 = vrot.slane %v12, 7
  %v26 = vsel %vm24, %v25, %v18
  %v27 = vrot.slane %v14, 7
  %v28 = vsel %vm24, %v27, %v19
  %v33 = vsel %vm24, %v18, %v25
  %v34 = vsel %vm24, %v19, %v27
  %vm35 = vcmask 1046528
  %v36 = vrot.slane %v12, 1
  %v37 = vrot.slane %v13, 1
  %v38 = vsel %vm35, %v36, %v37
  %v39 = vrot.slane %v14, 1
  %v40 = vrot.slane %v15, 1
  %v41 = vsel %vm35, %v39, %v40
  %v46 = vsel %vm35, %v37, %v36
  %v47 = vsel %vm35, %v40, %v39
  %48 = vrot.lane.b32.xlu0 %v12, 4
  %v49 = vpop.permute.xlu0 %48
  %50 = vrot.lane.b32.xlu0 %v13, 4
  %v51 = vpop.permute.xlu0 %50
  %52 = vrot.lane.b32.xlu0 %v14, 4
  %v53 = vpop.permute.xlu0 %52
  %54 = vrot.lane.b32.xlu0 %v15, 4
  %v55 = vpop.permute.xlu0 %54
  %62 = vrot.lane.b32.xlu0 %v38, 8
  %v63 = vpop.permute.xlu0 %62
  %64 = vrot.lane.b32.xlu0 %v46, 8
  %v65 = vpop.permute.xlu0 %64
  %66 = vrot.lane.b32.xlu0 %v41, 8
  %v67 = vpop.permute.xlu0 %66
  %68 = vrot.lane.b32.xlu0 %v47, 8
  %v69 = vpop.permute.xlu0 %68
  %vm74 = vcmask 31744
  %v75 = vsel %vm74, %v33, %v49
  %v76 = vsel %vm74, %v26, %v51
  %v77 = vsel %vm74, %v34, %v53
  %v78 = vsel %vm74, %v28, %v55
  %vm79 = vcmask 64512
  %v80 = vsel %vm79, %v75, %v63
  %v81 = vsel %vm79, %v76, %v65
  %v82 = vsel %vm79, %v77, %v67
  %v83 = vsel %vm79, %v78, %v69
  %v84 = vpack.c.bf16 %v81, %v80
  %v85 = vpack.c.bf16 %v83, %v82
  %v86 = vld [vmem:[%s1] sm:$0xf]
  %v87 = vld [vmem:[%s1 + $0x4] sm:$0x3]
  %v90 = vunpack.c.l.b16 %v86
  %v91 = vunpack.c.l.b16 %v87
  %v92 = vpack.c.b16 %v91, %v90
  %vm93 = vcmask 97280
  %v95 = vsel %vm93, %v84, 0
  %v98 = vsel %vm93, %v85, 0
  %vm100 = vcmask 1045504
  %v102 = vsel %vm100, %v92, 0
  %104 = vmatprep.subr.bf16.mxu0 0
  %105 = vmatpush1.bf16.msra.mxu0 %v102
  %106 = vmatprep.subr.bf16.mxu0 0
  %107 = vmatpush1.bf16.msra.mxu0 0
  %108 = vmatprep.subr.bf16.mxu0 0
  %109 = vmatpush1.bf16.msra.mxu0 0
  %110 = vmatprep.subr.bf16.mxu0 0
  %111 = vmatpush1.bf16.msra.mxu0 0
  %112 = vmatprep.subr.bf16.mxu0 0
  %113 = vmatpush1.bf16.msra.mxu0 0
  %114 = vmatprep.subr.bf16.mxu0 0
  %115 = vmatpush1.bf16.msra.mxu0 0
  %116 = vmatprep.subr.bf16.mxu0 0
  %117 = vmatpush1.bf16.msra.mxu0 0
  %118 = vmatprep.subr.bf16.mxu0 0
  %119 = vmatpush1.bf16.msra.mxu0 0
  %120 = vmatprep.subr.bf16.mxu0 0
  %121 = vmatpush1.bf16.msra.mxu0 0
  %122 = vmatprep.subr.bf16.mxu0 0
  %123 = vmatpush1.bf16.msra.mxu0 0
  %124 = vmatprep.subr.bf16.mxu0 0
  %125 = vmatpush1.bf16.msra.mxu0 0
  %126 = vmatprep.subr.bf16.mxu0 0
  %127 = vmatpush1.bf16.msra.mxu0 0
  %128 = vmatprep.subr.bf16.mxu0 0
  %129 = vmatpush1.bf16.msra.mxu0 0
  %130 = vmatprep.subr.bf16.mxu0 0
  %131 = vmatpush1.bf16.msra.mxu0 0
  %132 = vmatprep.subr.bf16.mxu0 0
  %133 = vmatpush1.bf16.msra.mxu0 0
  %134 = vmatprep.subr.bf16.mxu0 0
  %135 = vmatpush1.bf16.msra.mxu0 0
  %136 = vmatprep.mubr.bf16.mxu0 0
  %137 = vmatmul.mubr.bf16.gmra.mrb[0].mxu0 %v95
  %v138 = vpop.f32.mrb[0].mxu0
  %v139 = vadd.f32 0.0, %v138
  %v140 = vpop.f32.mrb[0].mxu0
  %v141 = vpop.f32.mrb[0].mxu0
  %v142 = vadd.f32 0.0, %v141
  %v143 = vpop.f32.mrb[0].mxu0
  %144 = vmatprep.mubr.bf16.mxu0 0
  %145 = vmatmul.mubr.bf16.gmra.mrb[0].mxu0 %v98
  %v146 = vpop.f32.mrb[0].mxu0
  %v147 = vadd.f32 0.0, %v146
  %v148 = vpop.f32.mrb[0].mxu0
  %v149 = vpop.f32.mrb[0].mxu0
  %v150 = vadd.f32 0.0, %v149
  %v151 = vpop.f32.mrb[0].mxu0
  %152 = vdwg.mxu0
  %vm153 = vcmask 261120
  %154 = vst.msk [vmem:[%s2] sm:$0xff] %vm153, %v139
  %155 = vst.msk [vmem:[%s2 + $0x8] sm:$0xff] %vm153, %v142
  %156 = vst.msk [vmem:[%s2 + $0x10] sm:$0xff] %vm153, %v147
  %157 = vst.msk [vmem:[%s2 + $0x18] sm:$0xff] %vm153, %v150
  // Predicated region
  $region10: #{_lambda_.5} parent=0 // pred_check
    _
  $region11: #{_lambda_.5} parent=0 // pred_check_branch
    %159 = sbr.rel (0) target = $region13
  $region12: #{_lambda_.5} parent=0 // pred_region
    _
  $region13: #{_lambda_.5} parent=0 // pred_fallthru
    _
  // Predicated region
  $region14: #{_lambda_.5} parent=0 // pred_check
    _
  $region15: #{_lambda_.5} parent=0 // pred_check_branch
    %161 = sbr.rel (0) target = $region17
  $region16: #{_lambda_.5} parent=0 // pred_region
    _
  $region17: #{_lambda_.5} parent=0 // pred_fallthru
    _

// kernel: reverse.5
$region0: #{reverse.5}
  %s0 = inlined_call_operand.vmem [shape: f32[2,4,8,7], index: 0, kind: input, shape index: {}]
  %s1 = inlined_call_operand.vmem [shape: f32[2,4,8,7], index: 1, kind: output, shape index: {}]
  %v2 = vlaneseq
  %v3 = vsub.s32 6, %v2
  %4 = vset.pattern.permute.xlu0 %v3
  $region1: #{reverse.5} parent=0
    #allocation0 [shape = 'u8[32768]{0}', space=vmem, size = 0x8000, scoped, tag = 'operand span for operand 0']
    #allocation1 [shape = 'u8[32768]{0}', space=vmem, size = 0x8000, scoped, tag = 'operand span for operand 1']
    // Predicated region
    $region2: #{reverse.5} parent=1 // pred_check
      _
    $region3: #{reverse.5} parent=1 // pred_check_branch
      %6 = sbr.rel (0) target = $region5
    $region4: #{reverse.5} parent=1 // pred_region
      // Predicated region
      $region6: #{reverse.5} parent=4 // pred_check
        _
      $region7: #{reverse.5} parent=4 // pred_check_branch
        %8 = sbr.rel (0) target = $region9
      $region8: #{reverse.5} parent=4 // pred_region
        // Predicated region
        $region21: #{reverse.5} parent=8 // pred_check
          _
        $region22: #{reverse.5} parent=8 // pred_check_branch
          %37 = sbr.rel (0) target = $region24
        $region23: #{reverse.5} parent=8 // pred_region
          loop: start=0, step=1, limit=1
          $region25: #{reverse.5} parent=23 // loop_pre_header
            _
          $region26: #{reverse.5} parent=23 // loop_header
            %s39 = sphi 0, %s43
            %p40 = scmp.ge.s32.totalorder %s39, 1
            %s44 = sphi %s0, %s0
            %s45 = sphi [#allocation0], [#allocation0]
          $region27: #{reverse.5} parent=23 // loop_header_branch
            %42 = sbr.rel (%p40) target = $region31
          $region28: #{reverse.5} parent=23 // loop_body
            %v46 = vld [vmem:[%s44] sm:$0xff]
            %47 = vst [vmem:[%s45] sm:$0xff] %v46
            %v48 = vld [vmem:[%s44 + $0x8] sm:$0xff]
            %49 = vst [vmem:[%s45 + $0x8] sm:$0xff] %v48
            %v50 = vld [vmem:[%s44 + $0x10] sm:$0xff]
            %51 = vst [vmem:[%s45 + $0x10] sm:$0xff] %v50
            %v52 = vld [vmem:[%s44 + $0x18] sm:$0xff]
            %53 = vst [vmem:[%s45 + $0x18] sm:$0xff] %v52
            %v54 = vld [vmem:[%s44 + $0x20] sm:$0xff]
            %55 = vst [vmem:[%s45 + $0x20] sm:$0xff] %v54
            %v56 = vld [vmem:[%s44 + $0x28] sm:$0xff]
            %57 = vst [vmem:[%s45 + $0x28] sm:$0xff] %v56
            %v58 = vld [vmem:[%s44 + $0x30] sm:$0xff]
            %59 = vst [vmem:[%s45 + $0x30] sm:$0xff] %v58
            %v60 = vld [vmem:[%s44 + $0x38] sm:$0xff]
            %61 = vst [vmem:[%s45 + $0x38] sm:$0xff] %v60
          $region29: #{reverse.5} parent=23 // loop_footer
            %s43 = sadd.s32 1, %s39
          $region30: #{reverse.5} parent=23 // loop_footer_branch
            %38 = sbr.rel target = $region26
          $region31: #{reverse.5} parent=23 // loop_exit
            _
        $region24: #{reverse.5} parent=8 // pred_fallthru
          _
        // Predicated region
        $region32: #{reverse.5} parent=8 // pred_check
          _
        $region33: #{reverse.5} parent=8 // pred_check_branch
          %63 = sbr.rel target = $region35
        $region34: #{reverse.5} parent=8 // pred_region
          _
        $region35: #{reverse.5} parent=8 // pred_fallthru
          _
      $region9: #{reverse.5} parent=4 // pred_fallthru
        _
      // Predicated region
      $region10: #{reverse.5} parent=4 // pred_check
        _
      $region11: #{reverse.5} parent=4 // pred_check_branch
        %10 = sbr.rel target = $region13
      $region12: #{reverse.5} parent=4 // pred_region
        loop: start=0, step=1, limit=1
        $region14: #{reverse.5} parent=12 // loop_pre_header
          _
        $region15: #{reverse.5} parent=12 // loop_header
          %s13 = sphi 0, %s17
          %p14 = scmp.ge.s32.totalorder %s13, 1
          %s18 = sphi %s0, %s0
          %s19 = sphi [#allocation0], [#allocation0]
        $region16: #{reverse.5} parent=12 // loop_header_branch
          %16 = sbr.rel (%p14) target = $region20
        $region17: #{reverse.5} parent=12 // loop_body
          %v20 = vld [vmem:[%s18] sm:$0xff]
          %21 = vst [vmem:[%s19] sm:$0xff] %v20
          %v22 = vld [vmem:[%s18 + $0x8] sm:$0xff]
          %23 = vst [vmem:[%s19 + $0x8] sm:$0xff] %v22
          %v24 = vld [vmem:[%s18 + $0x10] sm:$0xff]
          %25 = vst [vmem:[%s19 + $0x10] sm:$0xff] %v24
          %v26 = vld [vmem:[%s18 + $0x18] sm:$0xff]
          %27 = vst [vmem:[%s19 + $0x18] sm:$0xff] %v26
          %v28 = vld [vmem:[%s18 + $0x20] sm:$0xff]
          %29 = vst [vmem:[%s19 + $0x20] sm:$0xff] %v28
          %v30 = vld [vmem:[%s18 + $0x28] sm:$0xff]
          %31 = vst [vmem:[%s19 + $0x28] sm:$0xff] %v30
          %v32 = vld [vmem:[%s18 + $0x30] sm:$0xff]
          %33 = vst [vmem:[%s19 + $0x30] sm:$0xff] %v32
          %v34 = vld [vmem:[%s18 + $0x38] sm:$0xff]
          %35 = vst [vmem:[%s19 + $0x38] sm:$0xff] %v34
        $region18: #{reverse.5} parent=12 // loop_footer
          %s17 = sadd.s32 1, %s13
        $region19: #{reverse.5} parent=12 // loop_footer_branch
          %12 = sbr.rel target = $region15
        $region20: #{reverse.5} parent=12 // loop_exit
          _
      $region13: #{reverse.5} parent=4 // pred_fallthru
        _
    $region5: #{reverse.5} parent=1 // pred_fallthru
      _
    %64 = vnop
    %v65 = vld [vmem:[#allocation0] sm:$0xff]
    %66 = vperm.xlu0 %4, %v65
    %v67 = vpop.permute.xlu0 %66
    %68 = vst [vmem:[#allocation1] sm:$0xff] %v67
    %s69 = scalar_lea.vmem [#allocation1], 8
    %s70 = scalar_lea.vmem [#allocation0], 8
    %v71 = vld [vmem:[%s70] sm:$0xff]
    %72 = vperm.xlu0 %4, %v71
    %v73 = vpop.permute.xlu0 %72
    %74 = vst [vmem:[%s69] sm:$0xff] %v73
    %s75 = scalar_lea.vmem [#allocation1], 16
    %s76 = scalar_lea.vmem [#allocation0], 16
    %v77 = vld [vmem:[%s76] sm:$0xff]
    %78 = vperm.xlu0 %4, %v77
    %v79 = vpop.permute.xlu0 %78
    %80 = vst [vmem:[%s75] sm:$0xff] %v79
    %s81 = scalar_lea.vmem [#allocation1], 24
    %s82 = scalar_lea.vmem [#allocation0], 24
    %v83 = vld [vmem:[%s82] sm:$0xff]
    %84 = vperm.xlu0 %4, %v83
    %v85 = vpop.permute.xlu0 %84
    %86 = vst [vmem:[%s81] sm:$0xff] %v85
    %s87 = scalar_lea.vmem [#allocation1], 32
    %s88 = scalar_lea.vmem [#allocation0], 32
    %v89 = vld [vmem:[%s88] sm:$0xff]
    %90 = vperm.xlu0 %4, %v89
    %v91 = vpop.permute.xlu0 %90
    %92 = vst [vmem:[%s87] sm:$0xff] %v91
    %s93 = scalar_lea.vmem [#allocation1], 40
    %s94 = scalar_lea.vmem [#allocation0], 40
    %v95 = vld [vmem:[%s94] sm:$0xff]
    %96 = vperm.xlu0 %4, %v95
    %v97 = vpop.permute.xlu0 %96
    %98 = vst [vmem:[%s93] sm:$0xff] %v97
    %s99 = scalar_lea.vmem [#allocation1], 48
    %s100 = scalar_lea.vmem [#allocation0], 48
    %v101 = vld [vmem:[%s100] sm:$0xff]
    %102 = vperm.xlu0 %4, %v101
    %v103 = vpop.permute.xlu0 %102
    %104 = vst [vmem:[%s99] sm:$0xff] %v103
    %s105 = scalar_lea.vmem [#allocation1], 56
    %s106 = scalar_lea.vmem [#allocation0], 56
    %v107 = vld [vmem:[%s106] sm:$0xff]
    %108 = vperm.xlu0 %4, %v107
    %v109 = vpop.permute.xlu0 %108
    %110 = vst [vmem:[%s105] sm:$0xff] %v109
    // Predicated region
    $region36: #{reverse.5} parent=1 // pred_check
      _
    $region37: #{reverse.5} parent=1 // pred_check_branch
      %112 = sbr.rel (0) target = $region39
    $region38: #{reverse.5} parent=1 // pred_region
      // Predicated region
      $region40: #{reverse.5} parent=38 // pred_check
        _
      $region41: #{reverse.5} parent=38 // pred_check_branch
        %114 = sbr.rel (0) target = $region43
      $region42: #{reverse.5} parent=38 // pred_region
        // Predicated region
        $region55: #{reverse.5} parent=42 // pred_check
          _
        $region56: #{reverse.5} parent=42 // pred_check_branch
          %143 = sbr.rel (0) target = $region58
        $region57: #{reverse.5} parent=42 // pred_region
          loop: start=0, step=1, limit=1
          $region59: #{reverse.5} parent=57 // loop_pre_header
            _
          $region60: #{reverse.5} parent=57 // loop_header
            %s145 = sphi 0, %s149
            %p146 = scmp.ge.s32.totalorder %s145, 1
            %s150 = sphi [#allocation1], [#allocation1]
            %s151 = sphi %s1, %s1
          $region61: #{reverse.5} parent=57 // loop_header_branch
            %148 = sbr.rel (%p146) target = $region65
          $region62: #{reverse.5} parent=57 // loop_body
            %v152 = vld [vmem:[%s150] sm:$0xff]
            %153 = vst [vmem:[%s151] sm:$0xff] %v152
            %v154 = vld [vmem:[%s150 + $0x8] sm:$0xff]
            %155 = vst [vmem:[%s151 + $0x8] sm:$0xff] %v154
            %v156 = vld [vmem:[%s150 + $0x10] sm:$0xff]
            %157 = vst [vmem:[%s151 + $0x10] sm:$0xff] %v156
            %v158 = vld [vmem:[%s150 + $0x18] sm:$0xff]
            %159 = vst [vmem:[%s151 + $0x18] sm:$0xff] %v158
            %v160 = vld [vmem:[%s150 + $0x20] sm:$0xff]
            %161 = vst [vmem:[%s151 + $0x20] sm:$0xff] %v160
            %v162 = vld [vmem:[%s150 + $0x28] sm:$0xff]
            %163 = vst [vmem:[%s151 + $0x28] sm:$0xff] %v162
            %v164 = vld [vmem:[%s150 + $0x30] sm:$0xff]
            %165 = vst [vmem:[%s151 + $0x30] sm:$0xff] %v164
            %v166 = vld [vmem:[%s150 + $0x38] sm:$0xff]
            %167 = vst [vmem:[%s151 + $0x38] sm:$0xff] %v166
          $region63: #{reverse.5} parent=57 // loop_footer
            %s149 = sadd.s32 1, %s145
          $region64: #{reverse.5} parent=57 // loop_footer_branch
            %144 = sbr.rel target = $region60
          $region65: #{reverse.5} parent=57 // loop_exit
            _
        $region58: #{reverse.5} parent=42 // pred_fallthru
          _
        // Predicated region
        $region66: #{reverse.5} parent=42 // pred_check
          _
        $region67: #{reverse.5} parent=42 // pred_check_branch
          %169 = sbr.rel target = $region69
        $region68: #{reverse.5} parent=42 // pred_region
          _
        $region69: #{reverse.5} parent=42 // pred_fallthru
          _
      $region43: #{reverse.5} parent=38 // pred_fallthru
        _
      // Predicated region
      $region44: #{reverse.5} parent=38 // pred_check
        _
      $region45: #{reverse.5} parent=38 // pred_check_branch
        %116 = sbr.rel target = $region47
      $region46: #{reverse.5} parent=38 // pred_region
        loop: start=0, step=1, limit=1
        $region48: #{reverse.5} parent=46 // loop_pre_header
          _
        $region49: #{reverse.5} parent=46 // loop_header
          %s119 = sphi 0, %s123
          %p120 = scmp.ge.s32.totalorder %s119, 1
          %s124 = sphi [#allocation1], [#allocation1]
          %s125 = sphi %s1, %s1
        $region50: #{reverse.5} parent=46 // loop_header_branch
          %122 = sbr.rel (%p120) target = $region54
        $region51: #{reverse.5} parent=46 // loop_body
          %v126 = vld [vmem:[%s124] sm:$0xff]
          %127 = vst [vmem:[%s125] sm:$0xff] %v126
          %v128 = vld [vmem:[%s124 + $0x8] sm:$0xff]
          %129 = vst [vmem:[%s125 + $0x8] sm:$0xff] %v128
          %v130 = vld [vmem:[%s124 + $0x10] sm:$0xff]
          %131 = vst [vmem:[%s125 + $0x10] sm:$0xff] %v130
          %v132 = vld [vmem:[%s124 + $0x18] sm:$0xff]
          %133 = vst [vmem:[%s125 + $0x18] sm:$0xff] %v132
          %v134 = vld [vmem:[%s124 + $0x20] sm:$0xff]
          %135 = vst [vmem:[%s125 + $0x20] sm:$0xff] %v134
          %v136 = vld [vmem:[%s124 + $0x28] sm:$0xff]
          %137 = vst [vmem:[%s125 + $0x28] sm:$0xff] %v136
          %v138 = vld [vmem:[%s124 + $0x30] sm:$0xff]
          %139 = vst [vmem:[%s125 + $0x30] sm:$0xff] %v138
          %v140 = vld [vmem:[%s124 + $0x38] sm:$0xff]
          %141 = vst [vmem:[%s125 + $0x38] sm:$0xff] %v140
        $region52: #{reverse.5} parent=46 // loop_footer
          %s123 = sadd.s32 1, %s119
        $region53: #{reverse.5} parent=46 // loop_footer_branch
          %118 = sbr.rel target = $region49
        $region54: #{reverse.5} parent=46 // loop_exit
          _
      $region47: #{reverse.5} parent=38 // pred_fallthru
        _
    $region39: #{reverse.5} parent=1 // pred_fallthru
      _
    %170 = vnop

// kernel: _lambda_.7
$region0: #{_lambda_.7}
  #allocation0 [shape = 'u32[]', space=smem, size = 0x4, offset = 0x4, fixed_abs, tag = 'smem constant byte address 0x4 - core index']
  #allocation1 [shape = 'u32[144,128]{1,0:T(1,128)}', space=vmem, size = 0x12000, scoped, tag = 'internal scratch']
  %s0 = inlined_call_operand.vmem [shape: f32[2,16,32], index: 0, kind: input, shape index: {}]
  %s1 = inlined_call_operand.vmem [shape: f32[2,16,32], index: 1, kind: input, shape index: {}]
  %s2 = inlined_call_operand.vmem [shape: f32[2,16,16], index: 2, kind: input, shape index: {}]
  %s3 = inlined_call_operand.vmem [shape: f32[16,16], index: 3, kind: input, shape index: {}]
  %s4 = inlined_call_operand.vmem [shape: f32[2,16,32], index: 4, kind: input, shape index: {}]
  %s5 = inlined_call_operand.vmem [shape: bf16[32,32], index: 5, kind: input, shape index: {}]
  %s6 = inlined_call_operand.vmem [shape: f32[1,32], index: 6, kind: input, shape index: {}]
  %s7 = inlined_call_operand.vmem [shape: bf16[32,64], index: 7, kind: input, shape index: {}]
  %s8 = inlined_call_operand.vmem [shape: bf16[64,32], index: 8, kind: input, shape index: {}]
  %s9 = inlined_call_operand.vmem [shape: f32[1,32], index: 9, kind: input, shape index: {}]
  %s10 = inlined_call_operand.vmem [shape: f32[1,32], index: 10, kind: input, shape index: {}]
  %s11 = inlined_call_operand.vmem [shape: f32[2,16,32], index: 11, kind: output, shape index: {0}]
  %s12 = inlined_call_operand.vmem [shape: f32[2,16,32], index: 12, kind: output, shape index: {1}]
  %13 = xla_tuple %s11, %s12
  %s14 = sld [smem:[#allocation0]]
  $region62: #{_lambda_.7} parent=0
    _
  %s16 = ssub.s32 1, %s14
  %s17 = scalar_select 0, %s16, %s14
  // Predicated region
  $region2: #{_lambda_.7} parent=0 // pred_check
    _
  $region3: #{_lambda_.7} parent=0 // pred_check_branch
    %19 = sbr.rel (0) target = $region5
  $region4: #{_lambda_.7} parent=0 // pred_region
    _
  $region5: #{_lambda_.7} parent=0 // pred_fallthru
    _
  // Predicated region
  $region6: #{_lambda_.7} parent=0 // pred_check
    _
  $region7: #{_lambda_.7} parent=0 // pred_check_branch
    %21 = sbr.rel (0) target = $region9
  $region8: #{_lambda_.7} parent=0 // pred_region
    _
  $region9: #{_lambda_.7} parent=0 // pred_fallthru
    _
  // Predicated region
  $region10: #{_lambda_.7} parent=0 // pred_check
    _
  $region11: #{_lambda_.7} parent=0 // pred_check_branch
    %23 = sbr.rel (0) target = $region13
  $region12: #{_lambda_.7} parent=0 // pred_region
    _
  $region13: #{_lambda_.7} parent=0 // pred_fallthru
    _
  // Predicated region
  $region14: #{_lambda_.7} parent=0 // pred_check
    _
  $region15: #{_lambda_.7} parent=0 // pred_check_branch
    %25 = sbr.rel (0) target = $region17
  $region16: #{_lambda_.7} parent=0 // pred_region
    _
  $region17: #{_lambda_.7} parent=0 // pred_fallthru
    _
  // Predicated region
  $region18: #{_lambda_.7} parent=0 // pred_check
    _
  $region19: #{_lambda_.7} parent=0 // pred_check_branch
    %27 = sbr.rel (0) target = $region21
  $region20: #{_lambda_.7} parent=0 // pred_region
    _
  $region21: #{_lambda_.7} parent=0 // pred_fallthru
    _
  // Predicated region
  $region22: #{_lambda_.7} parent=0 // pred_check
    _
  $region23: #{_lambda_.7} parent=0 // pred_check_branch
    %29 = sbr.rel (0) target = $region25
  $region24: #{_lambda_.7} parent=0 // pred_region
    _
  $region25: #{_lambda_.7} parent=0 // pred_fallthru
    _
  // Predicated region
  $region26: #{_lambda_.7} parent=0 // pred_check
    _
  $region27: #{_lambda_.7} parent=0 // pred_check_branch
    %31 = sbr.rel (0) target = $region29
  $region28: #{_lambda_.7} parent=0 // pred_region
    _
  $region29: #{_lambda_.7} parent=0 // pred_fallthru
    _
  // Predicated region
  $region30: #{_lambda_.7} parent=0 // pred_check
    _
  $region31: #{_lambda_.7} parent=0 // pred_check_branch
    %33 = sbr.rel (0) target = $region33
  $region32: #{_lambda_.7} parent=0 // pred_region
    _
  $region33: #{_lambda_.7} parent=0 // pred_fallthru
    _
  // Predicated region
  $region34: #{_lambda_.7} parent=0 // pred_check
    _
  $region35: #{_lambda_.7} parent=0 // pred_check_branch
    %35 = sbr.rel (0) target = $region37
  $region36: #{_lambda_.7} parent=0 // pred_region
    _
  $region37: #{_lambda_.7} parent=0 // pred_fallthru
    _
  // Predicated region
  $region38: #{_lambda_.7} parent=0 // pred_check
    _
  $region39: #{_lambda_.7} parent=0 // pred_check_branch
    %37 = sbr.rel (0) target = $region41
  $region40: #{_lambda_.7} parent=0 // pred_region
    _
  $region41: #{_lambda_.7} parent=0 // pred_fallthru
    _
  // Predicated region
  $region42: #{_lambda_.7} parent=0 // pred_check
    _
  $region43: #{_lambda_.7} parent=0 // pred_check_branch
    %39 = sbr.rel (0) target = $region45
  $region44: #{_lambda_.7} parent=0 // pred_region
    _
  $region45: #{_lambda_.7} parent=0 // pred_fallthru
    _
  %v41 = vld [vmem:[%s2] sm:$0xff]
  %v42 = vld [vmem:[%s2 + $0x8] sm:$0xff]
  %v43 = vld [vmem:[%s2 + $0x10] sm:$0xff]
  %v44 = vld [vmem:[%s2 + $0x18] sm:$0xff]
  %v45 = vld [vmem:[%s1] sm:$0xff]
  %v46 = vld [vmem:[%s1 + $0x8] sm:$0xff]
  %v47 = vld [vmem:[%s1 + $0x10] sm:$0xff]
  %v48 = vld [vmem:[%s1 + $0x18] sm:$0xff]
  %vm49 = vcmask 130048
  %v51 = vsel %vm49, %v41, 0
  %v54 = vsel %vm49, %v42, 0
  %56 = vmatprep.subr.mxu0 0.0
  %57 = vmatpush1.msra.mxu0 %v45
  %58 = vmatprep.subr.mxu0 0.0
  %59 = vmatpush1.msra.mxu0 %v46
  %60 = vmatprep.subr.mxu0 0.0
  %61 = vmatpush1.msra.mxu0 0.0
  %62 = vmatprep.subr.mxu0 0.0
  %63 = vmatpush1.msra.mxu0 0.0
  %64 = vmatprep.subr.mxu0 0.0
  %65 = vmatpush1.msra.mxu0 0.0
  %66 = vmatprep.subr.mxu0 0.0
  %67 = vmatpush1.msra.mxu0 0.0
  %68 = vmatprep.subr.mxu0 0.0
  %69 = vmatpush1.msra.mxu0 0.0
  %70 = vmatprep.subr.mxu0 0.0
  %71 = vmatpush1.msra.mxu0 0.0
  %72 = vmatprep.subr.mxu0 0.0
  %73 = vmatpush1.msra.mxu0 0.0
  %74 = vmatprep.subr.mxu0 0.0
  %75 = vmatpush1.msra.mxu0 0.0
  %76 = vmatprep.subr.mxu0 0.0
  %77 = vmatpush1.msra.mxu0 0.0
  %78 = vmatprep.subr.mxu0 0.0
  %79 = vmatpush1.msra.mxu0 0.0
  %80 = vmatprep.subr.mxu0 0.0
  %81 = vmatpush1.msra.mxu0 0.0
  %82 = vmatprep.subr.mxu0 0.0
  %83 = vmatpush1.msra.mxu0 0.0
  %84 = vmatprep.subr.mxu0 0.0
  %85 = vmatpush1.msra.mxu0 0.0
  %86 = vmatprep.subr.mxu0 0.0
  %87 = vmatpush1.msra.mxu0 0.0
  %88 = vmatprep.subr.mxu0 0.0
  %89 = vmatpush1.msra.mxu0 0.0
  %90 = vmatprep.subr.mxu0 0.0
  %91 = vmatpush1.msra.mxu0 0.0
  %92 = vmatprep.subr.mxu0 0.0
  %93 = vmatpush1.msra.mxu0 0.0
  %94 = vmatprep.subr.mxu0 0.0
  %95 = vmatpush1.msra.mxu0 0.0
  %96 = vmatprep.subr.mxu0 0.0
  %97 = vmatpush1.msra.mxu0 0.0
  %98 = vmatprep.subr.mxu0 0.0
  %99 = vmatpush1.msra.mxu0 0.0
  %100 = vmatprep.subr.mxu0 0.0
  %101 = vmatpush1.msra.mxu0 0.0
  %102 = vmatprep.subr.mxu0 0.0
  %103 = vmatpush1.msra.mxu0 0.0
  %104 = vmatprep.subr.mxu0 0.0
  %105 = vmatpush1.msra.mxu0 0.0
  %106 = vmatprep.subr.mxu0 0.0
  %107 = vmatpush1.msra.mxu0 0.0
  %108 = vmatprep.subr.mxu0 0.0
  %109 = vmatpush1.msra.mxu0 0.0
  %110 = vmatprep.subr.mxu0 0.0
  %111 = vmatpush1.msra.mxu0 0.0
  %112 = vmatprep.subr.mxu0 0.0
  %113 = vmatpush1.msra.mxu0 0.0
  %114 = vmatprep.subr.mxu0 0.0
  %115 = vmatpush1.msra.mxu0 0.0
  %116 = vmatprep.subr.mxu0 0.0
  %117 = vmatpush1.msra.mxu0 0.0
  %118 = vmatprep.subr.mxu0 0.0
  %119 = vmatpush1.msra.mxu0 0.0
  %120 = vmatprep.mubr.f32.mxu0 0.0
  %121 = vmatmul.mubr.f32.gmra.mrb[0].mxu0 %v51
  %v122 = vpop.f32.mrb[0].mxu0
  %v123 = vadd.f32 0.0, %v122
  %v124 = vpop.f32.mrb[0].mxu0
  %125 = vmatprep.mubr.f32.mxu0 0.0
  %126 = vmatmul.mubr.f32.gmra.mrb[0].mxu0 %v54
  %v127 = vpop.f32.mrb[0].mxu0
  %v128 = vadd.f32 0.0, %v127
  %v129 = vpop.f32.mrb[0].mxu0
  %130 = vdwg.mxu0
  %v132 = vsel %vm49, %v43, 0
  %v135 = vsel %vm49, %v44, 0
  %137 = vmatprep.subr.mxu0 0.0
  %138 = vmatpush1.msra.mxu0 %v47
  %139 = vmatprep.subr.mxu0 0.0
  %140 = vmatpush1.msra.mxu0 %v48
  %141 = vmatprep.subr.mxu0 0.0
  %142 = vmatpush1.msra.mxu0 0.0
  %143 = vmatprep.subr.mxu0 0.0
  %144 = vmatpush1.msra.mxu0 0.0
  %145 = vmatprep.subr.mxu0 0.0
  %146 = vmatpush1.msra.mxu0 0.0
  %147 = vmatprep.subr.mxu0 0.0
  %148 = vmatpush1.msra.mxu0 0.0
  %149 = vmatprep.subr.mxu0 0.0
  %150 = vmatpush1.msra.mxu0 0.0
  %151 = vmatprep.subr.mxu0 0.0
  %152 = vmatpush1.msra.mxu0 0.0
  %153 = vmatprep.subr.mxu0 0.0
  %154 = vmatpush1.msra.mxu0 0.0
  %155 = vmatprep.subr.mxu0 0.0
  %156 = vmatpush1.msra.mxu0 0.0
  %157 = vmatprep.subr.mxu0 0.0
  %158 = vmatpush1.msra.mxu0 0.0
  %159 = vmatprep.subr.mxu0 0.0
  %160 = vmatpush1.msra.mxu0 0.0
  %161 = vmatprep.subr.mxu0 0.0
  %162 = vmatpush1.msra.mxu0 0.0
  %163 = vmatprep.subr.mxu0 0.0
  %164 = vmatpush1.msra.mxu0 0.0
  %165 = vmatprep.subr.mxu0 0.0
  %166 = vmatpush1.msra.mxu0 0.0
  %167 = vmatprep.subr.mxu0 0.0
  %168 = vmatpush1.msra.mxu0 0.0
  %169 = vmatprep.subr.mxu0 0.0
  %170 = vmatpush1.msra.mxu0 0.0
  %171 = vmatprep.subr.mxu0 0.0
  %172 = vmatpush1.msra.mxu0 0.0
  %173 = vmatprep.subr.mxu0 0.0
  %174 = vmatpush1.msra.mxu0 0.0
  %175 = vmatprep.subr.mxu0 0.0
  %176 = vmatpush1.msra.mxu0 0.0
  %177 = vmatprep.subr.mxu0 0.0
  %178 = vmatpush1.msra.mxu0 0.0
  %179 = vmatprep.subr.mxu0 0.0
  %180 = vmatpush1.msra.mxu0 0.0
  %181 = vmatprep.subr.mxu0 0.0
  %182 = vmatpush1.msra.mxu0 0.0
  %183 = vmatprep.subr.mxu0 0.0
  %184 = vmatpush1.msra.mxu0 0.0
  %185 = vmatprep.subr.mxu0 0.0
  %186 = vmatpush1.msra.mxu0 0.0
  %187 = vmatprep.subr.mxu0 0.0
  %188 = vmatpush1.msra.mxu0 0.0
  %189 = vmatprep.subr.mxu0 0.0
  %190 = vmatpush1.msra.mxu0 0.0
  %191 = vmatprep.subr.mxu0 0.0
  %192 = vmatpush1.msra.mxu0 0.0
  %193 = vmatprep.subr.mxu0 0.0
  %194 = vmatpush1.msra.mxu0 0.0
  %195 = vmatprep.subr.mxu0 0.0
  %196 = vmatpush1.msra.mxu0 0.0
  %197 = vmatprep.subr.mxu0 0.0
  %198 = vmatpush1.msra.mxu0 0.0
  %199 = vmatprep.subr.mxu0 0.0
  %200 = vmatpush1.msra.mxu0 0.0
  %201 = vmatprep.mubr.f32.mxu0 0.0
  %202 = vmatmul.mubr.f32.gmra.mrb[0].mxu0 %v132
  %v203 = vpop.f32.mrb[0].mxu0
  %v204 = vadd.f32 0.0, %v203
  %v205 = vpop.f32.mrb[0].mxu0
  %206 = vmatprep.mubr.f32.mxu0 0.0
  %207 = vmatmul.mubr.f32.gmra.mrb[0].mxu0 %v135
  %v208 = vpop.f32.mrb[0].mxu0
  %v209 = vadd.f32 0.0, %v208
  %v210 = vpop.f32.mrb[0].mxu0
  %211 = vdwg.mxu0
  %v212 = vpack.c.bf16 %v128, %v123
  %v213 = vpack.c.bf16 %v209, %v204
  %v214 = vld [vmem:[%s5] sm:$0xf]
  %v215 = vld [vmem:[%s5 + $0x4] sm:$0xf]
  %v216 = vld [vmem:[%s5 + $0x8] sm:$0xf]
  %v217 = vld [vmem:[%s5 + $0xc] sm:$0xf]
  %v218 = vld [vmem:[%s6] sm:$0x1]
  %v220 = vlaneseq
  %v221 = vshrl.u32 %v220, 7
  %v222 = vsub.s32 0, %v221
  %v223 = vrot.slane %v218, %v222
  %v229 = vunpack.c.l.b16 %v214
  %v230 = vunpack.c.l.b16 %v215
  %v231 = vunpack.c.l.b16 %v216
  %v232 = vunpack.c.l.b16 %v217
  %v233 = vpack.c.b16 %v230, %v229
  %v234 = vpack.c.b16 %v232, %v231
  %vm237 = vcmask 261120
  %v239 = vsel %vm237, %v212, 0
  %v242 = vsel %vm237, %v213, 0
  %244 = vmatprep.subr.bf16.mxu0 0
  %245 = vmatpush1.bf16.msra.mxu0 %v233
  %246 = vmatprep.subr.bf16.mxu0 0
  %247 = vmatpush1.bf16.msra.mxu0 %v234
  %248 = vmatprep.subr.bf16.mxu0 0
  %249 = vmatpush1.bf16.msra.mxu0 0
  %250 = vmatprep.subr.bf16.mxu0 0
  %251 = vmatpush1.bf16.msra.mxu0 0
  %252 = vmatprep.subr.bf16.mxu0 0
  %253 = vmatpush1.bf16.msra.mxu0 0
  %254 = vmatprep.subr.bf16.mxu0 0
  %255 = vmatpush1.bf16.msra.mxu0 0
  %256 = vmatprep.subr.bf16.mxu0 0
  %257 = vmatpush1.bf16.msra.mxu0 0
  %258 = vmatprep.subr.bf16.mxu0 0
  %259 = vmatpush1.bf16.msra.mxu0 0
  %260 = vmatprep.subr.bf16.mxu0 0
  %261 = vmatpush1.bf16.msra.mxu0 0
  %262 = vmatprep.subr.bf16.mxu0 0
  %263 = vmatpush1.bf16.msra.mxu0 0
  %264 = vmatprep.subr.bf16.mxu0 0
  %265 = vmatpush1.bf16.msra.mxu0 0
  %266 = vmatprep.subr.bf16.mxu0 0
  %267 = vmatpush1.bf16.msra.mxu0 0
  %268 = vmatprep.subr.bf16.mxu0 0
  %269 = vmatpush1.bf16.msra.mxu0 0
  %270 = vmatprep.subr.bf16.mxu0 0
  %271 = vmatpush1.bf16.msra.mxu0 0
  %272 = vmatprep.subr.bf16.mxu0 0
  %273 = vmatpush1.bf16.msra.mxu0 0
  %274 = vmatprep.subr.bf16.mxu0 0
  %275 = vmatpush1.bf16.msra.mxu0 0
  %276 = vmatprep.mubr.bf16.mxu0 0
  %277 = vmatmul.mubr.bf16.gmra.mrb[0].mxu0 %v239
  %v278 = vpop.f32.mrb[0].mxu0
  %v279 = vadd.f32 %v223, %v278
  %v280 = vpop.f32.mrb[0].mxu0
  %v281 = vpop.f32.mrb[0].mxu0
  %v282 = vadd.f32 %v223, %v281
  %v283 = vpop.f32.mrb[0].mxu0
  %284 = vmatprep.mubr.bf16.mxu0 0
  %285 = vmatmul.mubr.bf16.gmra.mrb[0].mxu0 %v242
  %v286 = vpop.f32.mrb[0].mxu0
  %v287 = vadd.f32 %v223, %v286
  %v288 = vpop.f32.mrb[0].mxu0
  %v289 = vpop.f32.mrb[0].mxu0
  %v290 = vadd.f32 %v223, %v289
  %v291 = vpop.f32.mrb[0].mxu0
  %292 = vdwg.mxu0
  %v293 = vld [vmem:[%s0] sm:$0xff]
  %v294 = vld [vmem:[%s0 + $0x8] sm:$0xff]
  %v295 = vld [vmem:[%s0 + $0x10] sm:$0xff]
  %v296 = vld [vmem:[%s0 + $0x18] sm:$0xff]
  %v297 = vadd.f32 %v293, %v279
  %v298 = vadd.f32 %v294, %v282
  %v299 = vadd.f32 %v295, %v287
  %v300 = vadd.f32 %v296, %v290
  %v301 = vld [vmem:[%s3] sm:$0xff]
  %v302 = vld [vmem:[%s3 + $0x8] sm:$0xff]
  %v304 = vsel %vm49, %v301, 0
  %v307 = vsel %vm49, %v302, 0
  %309 = vmatprep.subr.mxu0 0.0
  %310 = vmatpush1.msra.mxu0 %v297
  %311 = vmatprep.subr.mxu0 0.0
  %312 = vmatpush1.msra.mxu0 %v298
  %313 = vmatprep.subr.mxu0 0.0
  %314 = vmatpush1.msra.mxu0 0.0
  %315 = vmatprep.subr.mxu0 0.0
  %316 = vmatpush1.msra.mxu0 0.0
  %317 = vmatprep.subr.mxu0 0.0
  %318 = vmatpush1.msra.mxu0 0.0
  %319 = vmatprep.subr.mxu0 0.0
  %320 = vmatpush1.msra.mxu0 0.0
  %321 = vmatprep.subr.mxu0 0.0
  %322 = vmatpush1.msra.mxu0 0.0
  %323 = vmatprep.subr.mxu0 0.0
  %324 = vmatpush1.msra.mxu0 0.0
  %325 = vmatprep.subr.mxu0 0.0
  %326 = vmatpush1.msra.mxu0 0.0
  %327 = vmatprep.subr.mxu0 0.0
  %328 = vmatpush1.msra.mxu0 0.0
  %329 = vmatprep.subr.mxu0 0.0
  %330 = vmatpush1.msra.mxu0 0.0
  %331 = vmatprep.subr.mxu0 0.0
  %332 = vmatpush1.msra.mxu0 0.0
  %333 = vmatprep.subr.mxu0 0.0
  %334 = vmatpush1.msra.mxu0 0.0
  %335 = vmatprep.subr.mxu0 0.0
  %336 = vmatpush1.msra.mxu0 0.0
  %337 = vmatprep.subr.mxu0 0.0
  %338 = vmatpush1.msra.mxu0 0.0
  %339 = vmatprep.subr.mxu0 0.0
  %340 = vmatpush1.msra.mxu0 0.0
  %341 = vmatprep.subr.mxu0 0.0
  %342 = vmatpush1.msra.mxu0 0.0
  %343 = vmatprep.subr.mxu0 0.0
  %344 = vmatpush1.msra.mxu0 0.0
  %345 = vmatprep.subr.mxu0 0.0
  %346 = vmatpush1.msra.mxu0 0.0
  %347 = vmatprep.subr.mxu0 0.0
  %348 = vmatpush1.msra.mxu0 0.0
  %349 = vmatprep.subr.mxu0 0.0
  %350 = vmatpush1.msra.mxu0 0.0
  %351 = vmatprep.subr.mxu0 0.0
  %352 = vmatpush1.msra.mxu0 0.0
  %353 = vmatprep.subr.mxu0 0.0
  %354 = vmatpush1.msra.mxu0 0.0
  %355 = vmatprep.subr.mxu0 0.0
  %356 = vmatpush1.msra.mxu0 0.0
  %357 = vmatprep.subr.mxu0 0.0
  %358 = vmatpush1.msra.mxu0 0.0
  %359 = vmatprep.subr.mxu0 0.0
  %360 = vmatpush1.msra.mxu0 0.0
  %361 = vmatprep.subr.mxu0 0.0
  %362 = vmatpush1.msra.mxu0 0.0
  %363 = vmatprep.subr.mxu0 0.0
  %364 = vmatpush1.msra.mxu0 0.0
  %365 = vmatprep.subr.mxu0 0.0
  %366 = vmatpush1.msra.mxu0 0.0
  %367 = vmatprep.subr.mxu0 0.0
  %368 = vmatpush1.msra.mxu0 0.0
  %369 = vmatprep.subr.mxu0 0.0
  %370 = vmatpush1.msra.mxu0 0.0
  %371 = vmatprep.subr.mxu0 0.0
  %372 = vmatpush1.msra.mxu0 0.0
  %373 = vmatprep.mubr.f32.mxu0 0.0
  %374 = vmatmul.mubr.f32.gmra.mrb[0].mxu0 %v304
  %v375 = vpop.f32.mrb[0].mxu0
  %v376 = vadd.f32 0.0, %v375
  %v377 = vpop.f32.mrb[0].mxu0
  %378 = vmatprep.mubr.f32.mxu0 0.0
  %379 = vmatmul.mubr.f32.gmra.mrb[0].mxu0 %v307
  %v380 = vpop.f32.mrb[0].mxu0
  %v381 = vadd.f32 0.0, %v380
  %v382 = vpop.f32.mrb[0].mxu0
  %383 = vdwg.mxu0
  %384 = vmatprep.subr.mxu0 0.0
  %385 = vmatpush1.msra.mxu0 %v299
  %386 = vmatprep.subr.mxu0 0.0
  %387 = vmatpush1.msra.mxu0 %v300
  %388 = vmatprep.subr.mxu0 0.0
  %389 = vmatpush1.msra.mxu0 0.0
  %390 = vmatprep.subr.mxu0 0.0
  %391 = vmatpush1.msra.mxu0 0.0
  %392 = vmatprep.subr.mxu0 0.0
  %393 = vmatpush1.msra.mxu0 0.0
  %394 = vmatprep.subr.mxu0 0.0
  %395 = vmatpush1.msra.mxu0 0.0
  %396 = vmatprep.subr.mxu0 0.0
  %397 = vmatpush1.msra.mxu0 0.0
  %398 = vmatprep.subr.mxu0 0.0
  %399 = vmatpush1.msra.mxu0 0.0
  %400 = vmatprep.subr.mxu0 0.0
  %401 = vmatpush1.msra.mxu0 0.0
  %402 = vmatprep.subr.mxu0 0.0
  %403 = vmatpush1.msra.mxu0 0.0
  %404 = vmatprep.subr.mxu0 0.0
  %405 = vmatpush1.msra.mxu0 0.0
  %406 = vmatprep.subr.mxu0 0.0
  %407 = vmatpush1.msra.mxu0 0.0
  %408 = vmatprep.subr.mxu0 0.0
  %409 = vmatpush1.msra.mxu0 0.0
  %410 = vmatprep.subr.mxu0 0.0
  %411 = vmatpush1.msra.mxu0 0.0
  %412 = vmatprep.subr.mxu0 0.0
  %413 = vmatpush1.msra.mxu0 0.0
  %414 = vmatprep.subr.mxu0 0.0
  %415 = vmatpush1.msra.mxu0 0.0
  %416 = vmatprep.subr.mxu0 0.0
  %417 = vmatpush1.msra.mxu0 0.0
  %418 = vmatprep.subr.mxu0 0.0
  %419 = vmatpush1.msra.mxu0 0.0
  %420 = vmatprep.subr.mxu0 0.0
  %421 = vmatpush1.msra.mxu0 0.0
  %422 = vmatprep.subr.mxu0 0.0
  %423 = vmatpush1.msra.mxu0 0.0
  %424 = vmatprep.subr.mxu0 0.0
  %425 = vmatpush1.msra.mxu0 0.0
  %426 = vmatprep.subr.mxu0 0.0
  %427 = vmatpush1.msra.mxu0 0.0
  %428 = vmatprep.subr.mxu0 0.0
  %429 = vmatpush1.msra.mxu0 0.0
  %430 = vmatprep.subr.mxu0 0.0
  %431 = vmatpush1.msra.mxu0 0.0
  %432 = vmatprep.subr.mxu0 0.0
  %433 = vmatpush1.msra.mxu0 0.0
  %434 = vmatprep.subr.mxu0 0.0
  %435 = vmatpush1.msra.mxu0 0.0
  %436 = vmatprep.subr.mxu0 0.0
  %437 = vmatpush1.msra.mxu0 0.0
  %438 = vmatprep.subr.mxu0 0.0
  %439 = vmatpush1.msra.mxu0 0.0
  %440 = vmatprep.subr.mxu0 0.0
  %441 = vmatpush1.msra.mxu0 0.0
  %442 = vmatprep.subr.mxu0 0.0
  %443 = vmatpush1.msra.mxu0 0.0
  %444 = vmatprep.subr.mxu0 0.0
  %445 = vmatpush1.msra.mxu0 0.0
  %446 = vmatprep.subr.mxu0 0.0
  %447 = vmatpush1.msra.mxu0 0.0
  %448 = vmatprep.mubr.f32.mxu0 0.0
  %449 = vmatmul.mubr.f32.gmra.mrb[0].mxu0 %v304
  %v450 = vpop.f32.mrb[0].mxu0
  %v451 = vadd.f32 0.0, %v450
  %v452 = vpop.f32.mrb[0].mxu0
  %453 = vmatprep.mubr.f32.mxu0 0.0
  %454 = vmatmul.mubr.f32.gmra.mrb[0].mxu0 %v307
  %v455 = vpop.f32.mrb[0].mxu0
  %v456 = vadd.f32 0.0, %v455
  %v457 = vpop.f32.mrb[0].mxu0
  %458 = vdwg.mxu0
  %v459 = vsub.f32 %v297, %v376
  %v460 = vsub.f32 %v298, %v381
  %v461 = vsub.f32 %v299, %v451
  %v462 = vsub.f32 %v300, %v456
  %v463 = vpack.c.bf16 %v460, %v459
  %v464 = vpack.c.bf16 %v462, %v461
  %v465 = vld [vmem:[%s7] sm:$0xf]
  %v466 = vld [vmem:[%s7 + $0x4] sm:$0xf]
  %v467 = vld [vmem:[%s7 + $0x8] sm:$0xf]
  %v468 = vld [vmem:[%s7 + $0xc] sm:$0xf]
  %v473 = vunpack.c.l.b16 %v465
  %v474 = vunpack.c.l.b16 %v466
  %v475 = vunpack.c.l.b16 %v467
  %v476 = vunpack.c.l.b16 %v468
  %v477 = vpack.c.b16 %v474, %v473
  %v478 = vpack.c.b16 %v476, %v475
  %v482 = vsel %vm237, %v463, 0
  %v485 = vsel %vm237, %v464, 0
  %487 = vmatprep.subr.bf16.mxu0 0
  %488 = vmatpush1.bf16.msra.mxu0 %v477
  %489 = vmatprep.subr.bf16.mxu0 0
  %490 = vmatpush1.bf16.msra.mxu0 %v478
  %491 = vmatprep.subr.bf16.mxu0 0
  %492 = vmatpush1.bf16.msra.mxu0 0
  %493 = vmatprep.subr.bf16.mxu0 0
  %494 = vmatpush1.bf16.msra.mxu0 0
  %495 = vmatprep.subr.bf16.mxu0 0
  %496 = vmatpush1.bf16.msra.mxu0 0
  %497 = vmatprep.subr.bf16.mxu0 0
  %498 = vmatpush1.bf16.msra.mxu0 0
  %499 = vmatprep.subr.bf16.mxu0 0
  %500 = vmatpush1.bf16.msra.mxu0 0
  %501 = vmatprep.subr.bf16.mxu0 0
  %502 = vmatpush1.bf16.msra.mxu0 0
  %503 = vmatprep.subr.bf16.mxu0 0
  %504 = vmatpush1.bf16.msra.mxu0 0
  %505 = vmatprep.subr.bf16.mxu0 0
  %506 = vmatpush1.bf16.msra.mxu0 0
  %507 = vmatprep.subr.bf16.mxu0 0
  %508 = vmatpush1.bf16.msra.mxu0 0
  %509 = vmatprep.subr.bf16.mxu0 0
  %510 = vmatpush1.bf16.msra.mxu0 0
  %511 = vmatprep.subr.bf16.mxu0 0
  %512 = vmatpush1.bf16.msra.mxu0 0
  %513 = vmatprep.subr.bf16.mxu0 0
  %514 = vmatpush1.bf16.msra.mxu0 0
  %515 = vmatprep.subr.bf16.mxu0 0
  %516 = vmatpush1.bf16.msra.mxu0 0
  %517 = vmatprep.subr.bf16.mxu0 0
  %518 = vmatpush1.bf16.msra.mxu0 0
  %519 = vmatprep.mubr.bf16.mxu0 0
  %520 = vmatmul.mubr.bf16.gmra.mrb[0].mxu0 %v482
  %v521 = vpop.f32.mrb[0].mxu0
  %v522 = vadd.f32 0.0, %v521
  %v523 = vpop.f32.mrb[0].mxu0
  %v524 = vpop.f32.mrb[0].mxu0
  %v525 = vadd.f32 0.0, %v524
  %v526 = vpop.f32.mrb[0].mxu0
  %527 = vmatprep.mubr.bf16.mxu0 0
  %528 = vmatmul.mubr.bf16.gmra.mrb[0].mxu0 %v485
  %v529 = vpop.f32.mrb[0].mxu0
  %v530 = vadd.f32 0.0, %v529
  %v531 = vpop.f32.mrb[0].mxu0
  %v532 = vpop.f32.mrb[0].mxu0
  %v533 = vadd.f32 0.0, %v532
  %v534 = vpop.f32.mrb[0].mxu0
  %535 = vdwg.mxu0
  %v536 = vmax.f32 %v522, 0.0
  %v537 = vmax.f32 %v525, 0.0
  %v538 = vmax.f32 %v530, 0.0
  %v539 = vmax.f32 %v533, 0.0
  %v540 = vpack.c.bf16 %v537, %v536
  %v541 = vpack.c.bf16 %v539, %v538
  %v542 = vld [vmem:[%s8] sm:$0xf]
  %v543 = vld [vmem:[%s8 + $0x4] sm:$0xf]
  %v544 = vld [vmem:[%s8 + $0x8] sm:$0xf]
  %v545 = vld [vmem:[%s8 + $0xc] sm:$0xf]
  %v546 = vld [vmem:[%s8 + $0x10] sm:$0xf]
  %v547 = vld [vmem:[%s8 + $0x14] sm:$0xf]
  %v548 = vld [vmem:[%s8 + $0x18] sm:$0xf]
  %v549 = vld [vmem:[%s8 + $0x1c] sm:$0xf]
  %v558 = vunpack.c.l.b16 %v542
  %v559 = vunpack.c.l.b16 %v543
  %v560 = vunpack.c.l.b16 %v544
  %v561 = vunpack.c.l.b16 %v545
  %v562 = vunpack.c.l.b16 %v546
  %v563 = vunpack.c.l.b16 %v547
  %v564 = vunpack.c.l.b16 %v548
  %v565 = vunpack.c.l.b16 %v549
  %v566 = vpack.c.b16 %v559, %v558
  %v567 = vpack.c.b16 %v561, %v560
  %v568 = vpack.c.b16 %v563, %v562
  %v569 = vpack.c.b16 %v565, %v564
  %vm574 = vcmask 523264
  %v576 = vsel %vm574, %v540, 0
  %v579 = vsel %vm574, %v541, 0
  %581 = vmatprep.subr.bf16.mxu0 0
  %582 = vmatpush1.bf16.msra.mxu0 %v566
  %583 = vmatprep.subr.bf16.mxu0 0
  %584 = vmatpush1.bf16.msra.mxu0 %v567
  %585 = vmatprep.subr.bf16.mxu0 0
  %586 = vmatpush1.bf16.msra.mxu0 %v568
  %587 = vmatprep.subr.bf16.mxu0 0
  %588 = vmatpush1.bf16.msra.mxu0 %v569
  %589 = vmatprep.subr.bf16.mxu0 0
  %590 = vmatpush1.bf16.msra.mxu0 0
  %591 = vmatprep.subr.bf16.mxu0 0
  %592 = vmatpush1.bf16.msra.mxu0 0
  %593 = vmatprep.subr.bf16.mxu0 0
  %594 = vmatpush1.bf16.msra.mxu0 0
  %595 = vmatprep.subr.bf16.mxu0 0
  %596 = vmatpush1.bf16.msra.mxu0 0
  %597 = vmatprep.subr.bf16.mxu0 0
  %598 = vmatpush1.bf16.msra.mxu0 0
  %599 = vmatprep.subr.bf16.mxu0 0
  %600 = vmatpush1.bf16.msra.mxu0 0
  %601 = vmatprep.subr.bf16.mxu0 0
  %602 = vmatpush1.bf16.msra.mxu0 0
  %603 = vmatprep.subr.bf16.mxu0 0
  %604 = vmatpush1.bf16.msra.mxu0 0
  %605 = vmatprep.subr.bf16.mxu0 0
  %606 = vmatpush1.bf16.msra.mxu0 0
  %607 = vmatprep.subr.bf16.mxu0 0
  %608 = vmatpush1.bf16.msra.mxu0 0
  %609 = vmatprep.subr.bf16.mxu0 0
  %610 = vmatpush1.bf16.msra.mxu0 0
  %611 = vmatprep.subr.bf16.mxu0 0
  %612 = vmatpush1.bf16.msra.mxu0 0
  %613 = vmatprep.mubr.bf16.mxu0 0
  %614 = vmatmul.mubr.bf16.gmra.mrb[0].mxu0 %v576
  %v615 = vpop.f32.mrb[0].mxu0
  %v616 = vadd.f32 0.0, %v615
  %v617 = vpop.f32.mrb[0].mxu0
  %v618 = vpop.f32.mrb[0].mxu0
  %v619 = vadd.f32 0.0, %v618
  %v620 = vpop.f32.mrb[0].mxu0
  %621 = vmatprep.mubr.bf16.mxu0 0
  %622 = vmatmul.mubr.bf16.gmra.mrb[0].mxu0 %v579
  %v623 = vpop.f32.mrb[0].mxu0
  %v624 = vadd.f32 0.0, %v623
  %v625 = vpop.f32.mrb[0].mxu0
  %v626 = vpop.f32.mrb[0].mxu0
  %v627 = vadd.f32 0.0, %v626
  %v628 = vpop.f32.mrb[0].mxu0
  %629 = vdwg.mxu0
  %v630 = vadd.f32 %v459, %v616
  %v631 = vadd.f32 %v460, %v619
  %v632 = vadd.f32 %v461, %v624
  %v633 = vadd.f32 %v462, %v627
  %634 = vmatprep.subr.mxu0 0.0
  %635 = vmatpush1.msra.mxu0 %v630
  %636 = vmatprep.subr.mxu0 0.0
  %637 = vmatpush1.msra.mxu0 %v631
  %638 = vmatprep.subr.mxu0 0.0
  %639 = vmatpush1.msra.mxu0 0.0
  %640 = vmatprep.subr.mxu0 0.0
  %641 = vmatpush1.msra.mxu0 0.0
  %642 = vmatprep.subr.mxu0 0.0
  %643 = vmatpush1.msra.mxu0 0.0
  %644 = vmatprep.subr.mxu0 0.0
  %645 = vmatpush1.msra.mxu0 0.0
  %646 = vmatprep.subr.mxu0 0.0
  %647 = vmatpush1.msra.mxu0 0.0
  %648 = vmatprep.subr.mxu0 0.0
  %649 = vmatpush1.msra.mxu0 0.0
  %650 = vmatprep.subr.mxu0 0.0
  %651 = vmatpush1.msra.mxu0 0.0
  %652 = vmatprep.subr.mxu0 0.0
  %653 = vmatpush1.msra.mxu0 0.0
  %654 = vmatprep.subr.mxu0 0.0
  %655 = vmatpush1.msra.mxu0 0.0
  %656 = vmatprep.subr.mxu0 0.0
  %657 = vmatpush1.msra.mxu0 0.0
  %658 = vmatprep.subr.mxu0 0.0
  %659 = vmatpush1.msra.mxu0 0.0
  %660 = vmatprep.subr.mxu0 0.0
  %661 = vmatpush1.msra.mxu0 0.0
  %662 = vmatprep.subr.mxu0 0.0
  %663 = vmatpush1.msra.mxu0 0.0
  %664 = vmatprep.subr.mxu0 0.0
  %665 = vmatpush1.msra.mxu0 0.0
  %666 = vmatprep.subr.mxu0 0.0
  %667 = vmatpush1.msra.mxu0 0.0
  %668 = vmatprep.subr.mxu0 0.0
  %669 = vmatpush1.msra.mxu0 0.0
  %670 = vmatprep.subr.mxu0 0.0
  %671 = vmatpush1.msra.mxu0 0.0
  %672 = vmatprep.subr.mxu0 0.0
  %673 = vmatpush1.msra.mxu0 0.0
  %674 = vmatprep.subr.mxu0 0.0
  %675 = vmatpush1.msra.mxu0 0.0
  %676 = vmatprep.subr.mxu0 0.0
  %677 = vmatpush1.msra.mxu0 0.0
  %678 = vmatprep.subr.mxu0 0.0
  %679 = vmatpush1.msra.mxu0 0.0
  %680 = vmatprep.subr.mxu0 0.0
  %681 = vmatpush1.msra.mxu0 0.0
  %682 = vmatprep.subr.mxu0 0.0
  %683 = vmatpush1.msra.mxu0 0.0
  %684 = vmatprep.subr.mxu0 0.0
  %685 = vmatpush1.msra.mxu0 0.0
  %686 = vmatprep.subr.mxu0 0.0
  %687 = vmatpush1.msra.mxu0 0.0
  %688 = vmatprep.subr.mxu0 0.0
  %689 = vmatpush1.msra.mxu0 0.0
  %690 = vmatprep.subr.mxu0 0.0
  %691 = vmatpush1.msra.mxu0 0.0
  %692 = vmatprep.subr.mxu0 0.0
  %693 = vmatpush1.msra.mxu0 0.0
  %694 = vmatprep.subr.mxu0 0.0
  %695 = vmatpush1.msra.mxu0 0.0
  %696 = vmatprep.subr.mxu0 0.0
  %697 = vmatpush1.msra.mxu0 0.0
  %698 = vmatprep.mubr.f32.mxu0 0.0
  %699 = vmatmul.mubr.f32.gmra.mrb[0].mxu0 %v304
  %v700 = vpop.f32.mrb[0].mxu0
  %v701 = vadd.f32 0.0, %v700
  %v702 = vpop.f32.mrb[0].mxu0
  %703 = vmatprep.mubr.f32.mxu0 0.0
  %704 = vmatmul.mubr.f32.gmra.mrb[0].mxu0 %v307
  %v705 = vpop.f32.mrb[0].mxu0
  %v706 = vadd.f32 0.0, %v705
  %v707 = vpop.f32.mrb[0].mxu0
  %708 = vdwg.mxu0
  %709 = vmatprep.subr.mxu0 0.0
  %710 = vmatpush1.msra.mxu0 %v632
  %711 = vmatprep.subr.mxu0 0.0
  %712 = vmatpush1.msra.mxu0 %v633
  %713 = vmatprep.subr.mxu0 0.0
  %714 = vmatpush1.msra.mxu0 0.0
  %715 = vmatprep.subr.mxu0 0.0
  %716 = vmatpush1.msra.mxu0 0.0
  %717 = vmatprep.subr.mxu0 0.0
  %718 = vmatpush1.msra.mxu0 0.0
  %719 = vmatprep.subr.mxu0 0.0
  %720 = vmatpush1.msra.mxu0 0.0
  %721 = vmatprep.subr.mxu0 0.0
  %722 = vmatpush1.msra.mxu0 0.0
  %723 = vmatprep.subr.mxu0 0.0
  %724 = vmatpush1.msra.mxu0 0.0
  %725 = vmatprep.subr.mxu0 0.0
  %726 = vmatpush1.msra.mxu0 0.0
  %727 = vmatprep.subr.mxu0 0.0
  %728 = vmatpush1.msra.mxu0 0.0
  %729 = vmatprep.subr.mxu0 0.0
  %730 = vmatpush1.msra.mxu0 0.0
  %731 = vmatprep.subr.mxu0 0.0
  %732 = vmatpush1.msra.mxu0 0.0
  %733 = vmatprep.subr.mxu0 0.0
  %734 = vmatpush1.msra.mxu0 0.0
  %735 = vmatprep.subr.mxu0 0.0
  %736 = vmatpush1.msra.mxu0 0.0
  %737 = vmatprep.subr.mxu0 0.0
  %738 = vmatpush1.msra.mxu0 0.0
  %739 = vmatprep.subr.mxu0 0.0
  %740 = vmatpush1.msra.mxu0 0.0
  %741 = vmatprep.subr.mxu0 0.0
  %742 = vmatpush1.msra.mxu0 0.0
  %743 = vmatprep.subr.mxu0 0.0
  %744 = vmatpush1.msra.mxu0 0.0
  %745 = vmatprep.subr.mxu0 0.0
  %746 = vmatpush1.msra.mxu0 0.0
  %747 = vmatprep.subr.mxu0 0.0
  %748 = vmatpush1.msra.mxu0 0.0
  %749 = vmatprep.subr.mxu0 0.0
  %750 = vmatpush1.msra.mxu0 0.0
  %751 = vmatprep.subr.mxu0 0.0
  %752 = vmatpush1.msra.mxu0 0.0
  %753 = vmatprep.subr.mxu0 0.0
  %754 = vmatpush1.msra.mxu0 0.0
  %755 = vmatprep.subr.mxu0 0.0
  %756 = vmatpush1.msra.mxu0 0.0
  %757 = vmatprep.subr.mxu0 0.0
  %758 = vmatpush1.msra.mxu0 0.0
  %759 = vmatprep.subr.mxu0 0.0
  %760 = vmatpush1.msra.mxu0 0.0
  %761 = vmatprep.subr.mxu0 0.0
  %762 = vmatpush1.msra.mxu0 0.0
  %763 = vmatprep.subr.mxu0 0.0
  %764 = vmatpush1.msra.mxu0 0.0
  %765 = vmatprep.subr.mxu0 0.0
  %766 = vmatpush1.msra.mxu0 0.0
  %767 = vmatprep.subr.mxu0 0.0
  %768 = vmatpush1.msra.mxu0 0.0
  %769 = vmatprep.subr.mxu0 0.0
  %770 = vmatpush1.msra.mxu0 0.0
  %771 = vmatprep.subr.mxu0 0.0
  %772 = vmatpush1.msra.mxu0 0.0
  %773 = vmatprep.mubr.f32.mxu0 0.0
  %774 = vmatmul.mubr.f32.gmra.mrb[0].mxu0 %v304
  %v775 = vpop.f32.mrb[0].mxu0
  %v776 = vadd.f32 0.0, %v775
  %v777 = vpop.f32.mrb[0].mxu0
  %778 = vmatprep.mubr.f32.mxu0 0.0
  %779 = vmatmul.mubr.f32.gmra.mrb[0].mxu0 %v307
  %v780 = vpop.f32.mrb[0].mxu0
  %v781 = vadd.f32 0.0, %v780
  %v782 = vpop.f32.mrb[0].mxu0
  %783 = vdwg.mxu0
  %v784 = vsub.f32 %v630, %v701
  %v785 = vsub.f32 %v631, %v706
  %v786 = vsub.f32 %v632, %v776
  %v787 = vsub.f32 %v633, %v781
  %788 = vst.msk [vmem:[%s11] sm:$0xff] %vm237, %v784
  %789 = vst.msk [vmem:[%s11 + $0x8] sm:$0xff] %vm237, %v785
  %790 = vst.msk [vmem:[%s11 + $0x10] sm:$0xff] %vm237, %v786
  %791 = vst.msk [vmem:[%s11 + $0x18] sm:$0xff] %vm237, %v787
  %v792 = vld [vmem:[%s4] sm:$0xff]
  %v793 = vld [vmem:[%s4 + $0x8] sm:$0xff]
  %v794 = vld [vmem:[%s4 + $0x10] sm:$0xff]
  %v795 = vld [vmem:[%s4 + $0x18] sm:$0xff]
  %v796 = vadd.f32 %v792, %v376
  %v797 = vadd.f32 %v793, %v381
  %v798 = vadd.f32 %v794, %v451
  %v799 = vadd.f32 %v795, %v456
  %v800 = vadd.f32 %v796, %v701
  %v801 = vadd.f32 %v797, %v706
  %v802 = vadd.f32 %v798, %v776
  %v803 = vadd.f32 %v799, %v781
  %804 = vst.msk [vmem:[%s12] sm:$0xff] %vm237, %v800
  %805 = vst.msk [vmem:[%s12 + $0x8] sm:$0xff] %vm237, %v801
  %806 = vst.msk [vmem:[%s12 + $0x10] sm:$0xff] %vm237, %v802
  %807 = vst.msk [vmem:[%s12 + $0x18] sm:$0xff] %vm237, %v803
  // Predicated region
  $region46: #{_lambda_.7} parent=0 // pred_check
    _
  $region47: #{_lambda_.7} parent=0 // pred_check_branch
    %809 = sbr.rel (0) target = $region49
  $region48: #{_lambda_.7} parent=0 // pred_region
    _
  $region49: #{_lambda_.7} parent=0 // pred_fallthru
    _
  // Predicated region
  $region50: #{_lambda_.7} parent=0 // pred_check
    _
  $region51: #{_lambda_.7} parent=0 // pred_check_branch
    %811 = sbr.rel (0) target = $region53
  $region52: #{_lambda_.7} parent=0 // pred_region
    _
  $region53: #{_lambda_.7} parent=0 // pred_fallthru
    _
  // Predicated region
  $region54: #{_lambda_.7} parent=0 // pred_check
    _
  $region55: #{_lambda_.7} parent=0 // pred_check_branch
    %813 = sbr.rel (0) target = $region57
  $region56: #{_lambda_.7} parent=0 // pred_region
    _
  $region57: #{_lambda_.7} parent=0 // pred_fallthru
    _
  // Predicated region
  $region58: #{_lambda_.7} parent=0 // pred_check
    _
  $region59: #{_lambda_.7} parent=0 // pred_check_branch
    %815 = sbr.rel (0) target = $region61
  $region60: #{_lambda_.7} parent=0 // pred_region
    _
  $region61: #{_lambda_.7} parent=0 // pred_fallthru
    _

// kernel: _lambda_.9
$region0: #{_lambda_.9}
  #allocation0 [shape = 'u32[]', space=smem, size = 0x4, offset = 0x4, fixed_abs, tag = 'smem constant byte address 0x4 - core index']
  #allocation1 [shape = 'u32[144,128]{1,0:T(1,128)}', space=vmem, size = 0x12000, scoped, tag = 'internal scratch']
  %s0 = inlined_call_operand.vmem [shape: f32[2,16,32], index: 0, kind: input, shape index: {}]
  %s1 = inlined_call_operand.vmem [shape: f32[2,16,32], index: 1, kind: input, shape index: {}]
  %s2 = inlined_call_operand.vmem [shape: f32[2,16,16], index: 2, kind: input, shape index: {}]
  %s3 = inlined_call_operand.vmem [shape: f32[16,16], index: 3, kind: input, shape index: {}]
  %s4 = inlined_call_operand.vmem [shape: f32[2,16,32], index: 4, kind: input, shape index: {}]
  %s5 = inlined_call_operand.vmem [shape: bf16[32,32], index: 5, kind: input, shape index: {}]
  %s6 = inlined_call_operand.vmem [shape: f32[1,32], index: 6, kind: input, shape index: {}]
  %s7 = inlined_call_operand.vmem [shape: bf16[32,64], index: 7, kind: input, shape index: {}]
  %s8 = inlined_call_operand.vmem [shape: bf16[64,32], index: 8, kind: input, shape index: {}]
  %s9 = inlined_call_operand.vmem [shape: f32[1,32], index: 9, kind: input, shape index: {}]
  %s10 = inlined_call_operand.vmem [shape: f32[1,32], index: 10, kind: input, shape index: {}]
  %s11 = inlined_call_operand.hbm [shape: f32[2,16,32], index: 11, kind: output, shape index: {0}]
  %s12 = inlined_call_operand.hbm [shape: f32[2,16,32], index: 12, kind: output, shape index: {1}]
  %13 = xla_tuple %s11, %s12
  %s14 = sld [smem:[#allocation0]]
  $region62: #{_lambda_.9} parent=0
    _
  %s16 = ssub.s32 1, %s14
  %s17 = scalar_select 0, %s16, %s14
  $region1: #{_lambda_.9} parent=0
    #allocation2 [shape = 'u8[16384]{0}', space=vmem, size = 0x4000, scoped, tag = 'output window, operand 0, single buffered']
    #allocation3 [shape = 's32[1]{0}', space=sflag, size = 0x4, scoped, tag = 'scoped memory for _lambda_.9']
    #allocation4 [shape = 'u8[16384]{0}', space=vmem, size = 0x4000, scoped, tag = 'output window, operand 1, single buffered']
    #allocation5 [shape = 's32[1]{0}', space=sflag, size = 0x4, scoped, tag = 'scoped memory for _lambda_.9']
    %18 = vsyncpa [#allocation3], 0
    %19 = vsyncpa [#allocation5], 0
    // Predicated region
    $region2: #{_lambda_.9} parent=1 // pred_check
      _
    $region3: #{_lambda_.9} parent=1 // pred_check_branch
      %21 = sbr.rel (0) target = $region5
    $region4: #{_lambda_.9} parent=1 // pred_region
      _
    $region5: #{_lambda_.9} parent=1 // pred_fallthru
      _
    // Predicated region
    $region6: #{_lambda_.9} parent=1 // pred_check
      _
    $region7: #{_lambda_.9} parent=1 // pred_check_branch
      %23 = sbr.rel (0) target = $region9
    $region8: #{_lambda_.9} parent=1 // pred_region
      _
    $region9: #{_lambda_.9} parent=1 // pred_fallthru
      _
    // Predicated region
    $region10: #{_lambda_.9} parent=1 // pred_check
      _
    $region11: #{_lambda_.9} parent=1 // pred_check_branch
      %25 = sbr.rel (0) target = $region13
    $region12: #{_lambda_.9} parent=1 // pred_region
      _
    $region13: #{_lambda_.9} parent=1 // pred_fallthru
      _
    // Predicated region
    $region14: #{_lambda_.9} parent=1 // pred_check
      _
    $region15: #{_lambda_.9} parent=1 // pred_check_branch
      %27 = sbr.rel (0) target = $region17
    $region16: #{_lambda_.9} parent=1 // pred_region
      _
    $region17: #{_lambda_.9} parent=1 // pred_fallthru
      _
    // Predicated region
    $region18: #{_lambda_.9} parent=1 // pred_check
      _
    $region19: #{_lambda_.9} parent=1 // pred_check_branch
      %29 = sbr.rel (0) target = $region21
    $region20: #{_lambda_.9} parent=1 // pred_region
      _
    $region21: #{_lambda_.9} parent=1 // pred_fallthru
      _
    // Predicated region
    $region22: #{_lambda_.9} parent=1 // pred_check
      _
    $region23: #{_lambda_.9} parent=1 // pred_check_branch
      %31 = sbr.rel (0) target = $region25
    $region24: #{_lambda_.9} parent=1 // pred_region
      _
    $region25: #{_lambda_.9} parent=1 // pred_fallthru
      _
    // Predicated region
    $region26: #{_lambda_.9} parent=1 // pred_check
      _
    $region27: #{_lambda_.9} parent=1 // pred_check_branch
      %33 = sbr.rel (0) target = $region29
    $region28: #{_lambda_.9} parent=1 // pred_region
      _
    $region29: #{_lambda_.9} parent=1 // pred_fallthru
      _
    // Predicated region
    $region30: #{_lambda_.9} parent=1 // pred_check
      _
    $region31: #{_lambda_.9} parent=1 // pred_check_branch
      %35 = sbr.rel (0) target = $region33
    $region32: #{_lambda_.9} parent=1 // pred_region
      _
    $region33: #{_lambda_.9} parent=1 // pred_fallthru
      _
    // Predicated region
    $region34: #{_lambda_.9} parent=1 // pred_check
      _
    $region35: #{_lambda_.9} parent=1 // pred_check_branch
      %37 = sbr.rel (0) target = $region37
    $region36: #{_lambda_.9} parent=1 // pred_region
      _
    $region37: #{_lambda_.9} parent=1 // pred_fallthru
      _
    // Predicated region
    $region38: #{_lambda_.9} parent=1 // pred_check
      _
    $region39: #{_lambda_.9} parent=1 // pred_check_branch
      %39 = sbr.rel (0) target = $region41
    $region40: #{_lambda_.9} parent=1 // pred_region
      _
    $region41: #{_lambda_.9} parent=1 // pred_fallthru
      _
    // Predicated region
    $region42: #{_lambda_.9} parent=1 // pred_check
      _
    $region43: #{_lambda_.9} parent=1 // pred_check_branch
      %41 = sbr.rel (0) target = $region45
    $region44: #{_lambda_.9} parent=1 // pred_region
      _
    $region45: #{_lambda_.9} parent=1 // pred_fallthru
      _
    %v43 = vld [vmem:[%s2] sm:$0xff]
    %v44 = vld [vmem:[%s2 + $0x8] sm:$0xff]
    %v45 = vld [vmem:[%s2 + $0x10] sm:$0xff]
    %v46 = vld [vmem:[%s2 + $0x18] sm:$0xff]
    %v47 = vld [vmem:[%s1] sm:$0xff]
    %v48 = vld [vmem:[%s1 + $0x8] sm:$0xff]
    %v49 = vld [vmem:[%s1 + $0x10] sm:$0xff]
    %v50 = vld [vmem:[%s1 + $0x18] sm:$0xff]
    %vm51 = vcmask 130048
    %v53 = vsel %vm51, %v43, 0
    %v56 = vsel %vm51, %v44, 0
    %58 = vmatprep.subr.mxu0 0.0
    %59 = vmatpush1.msra.mxu0 %v47
    %60 = vmatprep.subr.mxu0 0.0
    %61 = vmatpush1.msra.mxu0 %v48
    %62 = vmatprep.subr.mxu0 0.0
    %63 = vmatpush1.msra.mxu0 0.0
    %64 = vmatprep.subr.mxu0 0.0
    %65 = vmatpush1.msra.mxu0 0.0
    %66 = vmatprep.subr.mxu0 0.0
    %67 = vmatpush1.msra.mxu0 0.0
    %68 = vmatprep.subr.mxu0 0.0
    %69 = vmatpush1.msra.mxu0 0.0
    %70 = vmatprep.subr.mxu0 0.0
    %71 = vmatpush1.msra.mxu0 0.0
    %72 = vmatprep.subr.mxu0 0.0
    %73 = vmatpush1.msra.mxu0 0.0
    %74 = vmatprep.subr.mxu0 0.0
    %75 = vmatpush1.msra.mxu0 0.0
    %76 = vmatprep.subr.mxu0 0.0
    %77 = vmatpush1.msra.mxu0 0.0
    %78 = vmatprep.subr.mxu0 0.0
    %79 = vmatpush1.msra.mxu0 0.0
    %80 = vmatprep.subr.mxu0 0.0
    %81 = vmatpush1.msra.mxu0 0.0
    %82 = vmatprep.subr.mxu0 0.0
    %83 = vmatpush1.msra.mxu0 0.0
    %84 = vmatprep.subr.mxu0 0.0
    %85 = vmatpush1.msra.mxu0 0.0
    %86 = vmatprep.subr.mxu0 0.0
    %87 = vmatpush1.msra.mxu0 0.0
    %88 = vmatprep.subr.mxu0 0.0
    %89 = vmatpush1.msra.mxu0 0.0
    %90 = vmatprep.subr.mxu0 0.0
    %91 = vmatpush1.msra.mxu0 0.0
    %92 = vmatprep.subr.mxu0 0.0
    %93 = vmatpush1.msra.mxu0 0.0
    %94 = vmatprep.subr.mxu0 0.0
    %95 = vmatpush1.msra.mxu0 0.0
    %96 = vmatprep.subr.mxu0 0.0
    %97 = vmatpush1.msra.mxu0 0.0
    %98 = vmatprep.subr.mxu0 0.0
    %99 = vmatpush1.msra.mxu0 0.0
    %100 = vmatprep.subr.mxu0 0.0
    %101 = vmatpush1.msra.mxu0 0.0
    %102 = vmatprep.subr.mxu0 0.0
    %103 = vmatpush1.msra.mxu0 0.0
    %104 = vmatprep.subr.mxu0 0.0
    %105 = vmatpush1.msra.mxu0 0.0
    %106 = vmatprep.subr.mxu0 0.0
    %107 = vmatpush1.msra.mxu0 0.0
    %108 = vmatprep.subr.mxu0 0.0
    %109 = vmatpush1.msra.mxu0 0.0
    %110 = vmatprep.subr.mxu0 0.0
    %111 = vmatpush1.msra.mxu0 0.0
    %112 = vmatprep.subr.mxu0 0.0
    %113 = vmatpush1.msra.mxu0 0.0
    %114 = vmatprep.subr.mxu0 0.0
    %115 = vmatpush1.msra.mxu0 0.0
    %116 = vmatprep.subr.mxu0 0.0
    %117 = vmatpush1.msra.mxu0 0.0
    %118 = vmatprep.subr.mxu0 0.0
    %119 = vmatpush1.msra.mxu0 0.0
    %120 = vmatprep.subr.mxu0 0.0
    %121 = vmatpush1.msra.mxu0 0.0
    %122 = vmatprep.mubr.f32.mxu0 0.0
    %123 = vmatmul.mubr.f32.gmra.mrb[0].mxu0 %v53
    %v124 = vpop.f32.mrb[0].mxu0
    %v125 = vadd.f32 0.0, %v124
    %v126 = vpop.f32.mrb[0].mxu0
    %127 = vmatprep.mubr.f32.mxu0 0.0
    %128 = vmatmul.mubr.f32.gmra.mrb[0].mxu0 %v56
    %v129 = vpop.f32.mrb[0].mxu0
    %v130 = vadd.f32 0.0, %v129
    %v131 = vpop.f32.mrb[0].mxu0
    %132 = vdwg.mxu0
    %v134 = vsel %vm51, %v45, 0
    %v137 = vsel %vm51, %v46, 0
    %139 = vmatprep.subr.mxu0 0.0
    %140 = vmatpush1.msra.mxu0 %v49
    %141 = vmatprep.subr.mxu0 0.0
    %142 = vmatpush1.msra.mxu0 %v50
    %143 = vmatprep.subr.mxu0 0.0
    %144 = vmatpush1.msra.mxu0 0.0
    %145 = vmatprep.subr.mxu0 0.0
    %146 = vmatpush1.msra.mxu0 0.0
    %147 = vmatprep.subr.mxu0 0.0
    %148 = vmatpush1.msra.mxu0 0.0
    %149 = vmatprep.subr.mxu0 0.0
    %150 = vmatpush1.msra.mxu0 0.0
    %151 = vmatprep.subr.mxu0 0.0
    %152 = vmatpush1.msra.mxu0 0.0
    %153 = vmatprep.subr.mxu0 0.0
    %154 = vmatpush1.msra.mxu0 0.0
    %155 = vmatprep.subr.mxu0 0.0
    %156 = vmatpush1.msra.mxu0 0.0
    %157 = vmatprep.subr.mxu0 0.0
    %158 = vmatpush1.msra.mxu0 0.0
    %159 = vmatprep.subr.mxu0 0.0
    %160 = vmatpush1.msra.mxu0 0.0
    %161 = vmatprep.subr.mxu0 0.0
    %162 = vmatpush1.msra.mxu0 0.0
    %163 = vmatprep.subr.mxu0 0.0
    %164 = vmatpush1.msra.mxu0 0.0
    %165 = vmatprep.subr.mxu0 0.0
    %166 = vmatpush1.msra.mxu0 0.0
    %167 = vmatprep.subr.mxu0 0.0
    %168 = vmatpush1.msra.mxu0 0.0
    %169 = vmatprep.subr.mxu0 0.0
    %170 = vmatpush1.msra.mxu0 0.0
    %171 = vmatprep.subr.mxu0 0.0
    %172 = vmatpush1.msra.mxu0 0.0
    %173 = vmatprep.subr.mxu0 0.0
    %174 = vmatpush1.msra.mxu0 0.0
    %175 = vmatprep.subr.mxu0 0.0
    %176 = vmatpush1.msra.mxu0 0.0
    %177 = vmatprep.subr.mxu0 0.0
    %178 = vmatpush1.msra.mxu0 0.0
    %179 = vmatprep.subr.mxu0 0.0
    %180 = vmatpush1.msra.mxu0 0.0
    %181 = vmatprep.subr.mxu0 0.0
    %182 = vmatpush1.msra.mxu0 0.0
    %183 = vmatprep.subr.mxu0 0.0
    %184 = vmatpush1.msra.mxu0 0.0
    %185 = vmatprep.subr.mxu0 0.0
    %186 = vmatpush1.msra.mxu0 0.0
    %187 = vmatprep.subr.mxu0 0.0
    %188 = vmatpush1.msra.mxu0 0.0
    %189 = vmatprep.subr.mxu0 0.0
    %190 = vmatpush1.msra.mxu0 0.0
    %191 = vmatprep.subr.mxu0 0.0
    %192 = vmatpush1.msra.mxu0 0.0
    %193 = vmatprep.subr.mxu0 0.0
    %194 = vmatpush1.msra.mxu0 0.0
    %195 = vmatprep.subr.mxu0 0.0
    %196 = vmatpush1.msra.mxu0 0.0
    %197 = vmatprep.subr.mxu0 0.0
    %198 = vmatpush1.msra.mxu0 0.0
    %199 = vmatprep.subr.mxu0 0.0
    %200 = vmatpush1.msra.mxu0 0.0
    %201 = vmatprep.subr.mxu0 0.0
    %202 = vmatpush1.msra.mxu0 0.0
    %203 = vmatprep.mubr.f32.mxu0 0.0
    %204 = vmatmul.mubr.f32.gmra.mrb[0].mxu0 %v134
    %v205 = vpop.f32.mrb[0].mxu0
    %v206 = vadd.f32 0.0, %v205
    %v207 = vpop.f32.mrb[0].mxu0
    %208 = vmatprep.mubr.f32.mxu0 0.0
    %209 = vmatmul.mubr.f32.gmra.mrb[0].mxu0 %v137
    %v210 = vpop.f32.mrb[0].mxu0
    %v211 = vadd.f32 0.0, %v210
    %v212 = vpop.f32.mrb[0].mxu0
    %213 = vdwg.mxu0
    %v214 = vpack.c.bf16 %v130, %v125
    %v215 = vpack.c.bf16 %v211, %v206
    %v216 = vld [vmem:[%s5] sm:$0xf]
    %v217 = vld [vmem:[%s5 + $0x4] sm:$0xf]
    %v218 = vld [vmem:[%s5 + $0x8] sm:$0xf]
    %v219 = vld [vmem:[%s5 + $0xc] sm:$0xf]
    %v220 = vld [vmem:[%s6] sm:$0x1]
    %v222 = vlaneseq
    %v223 = vshrl.u32 %v222, 7
    %v224 = vsub.s32 0, %v223
    %v225 = vrot.slane %v220, %v224
    %v231 = vunpack.c.l.b16 %v216
    %v232 = vunpack.c.l.b16 %v217
    %v233 = vunpack.c.l.b16 %v218
    %v234 = vunpack.c.l.b16 %v219
    %v235 = vpack.c.b16 %v232, %v231
    %v236 = vpack.c.b16 %v234, %v233
    %vm239 = vcmask 261120
    %v241 = vsel %vm239, %v214, 0
    %v244 = vsel %vm239, %v215, 0
    %246 = vmatprep.subr.bf16.mxu0 0
    %247 = vmatpush1.bf16.msra.mxu0 %v235
    %248 = vmatprep.subr.bf16.mxu0 0
    %249 = vmatpush1.bf16.msra.mxu0 %v236
    %250 = vmatprep.subr.bf16.mxu0 0
    %251 = vmatpush1.bf16.msra.mxu0 0
    %252 = vmatprep.subr.bf16.mxu0 0
    %253 = vmatpush1.bf16.msra.mxu0 0
    %254 = vmatprep.subr.bf16.mxu0 0
    %255 = vmatpush1.bf16.msra.mxu0 0
    %256 = vmatprep.subr.bf16.mxu0 0
    %257 = vmatpush1.bf16.msra.mxu0 0
    %258 = vmatprep.subr.bf16.mxu0 0
    %259 = vmatpush1.bf16.msra.mxu0 0
    %260 = vmatprep.subr.bf16.mxu0 0
    %261 = vmatpush1.bf16.msra.mxu0 0
    %262 = vmatprep.subr.bf16.mxu0 0
    %263 = vmatpush1.bf16.msra.mxu0 0
    %264 = vmatprep.subr.bf16.mxu0 0
    %265 = vmatpush1.bf16.msra.mxu0 0
    %266 = vmatprep.subr.bf16.mxu0 0
    %267 = vmatpush1.bf16.msra.mxu0 0
    %268 = vmatprep.subr.bf16.mxu0 0
    %269 = vmatpush1.bf16.msra.mxu0 0
    %270 = vmatprep.subr.bf16.mxu0 0
    %271 = vmatpush1.bf16.msra.mxu0 0
    %272 = vmatprep.subr.bf16.mxu0 0
    %273 = vmatpush1.bf16.msra.mxu0 0
    %274 = vmatprep.subr.bf16.mxu0 0
    %275 = vmatpush1.bf16.msra.mxu0 0
    %276 = vmatprep.subr.bf16.mxu0 0
    %277 = vmatpush1.bf16.msra.mxu0 0
    %278 = vmatprep.mubr.bf16.mxu0 0
    %279 = vmatmul.mubr.bf16.gmra.mrb[0].mxu0 %v241
    %v280 = vpop.f32.mrb[0].mxu0
    %v281 = vadd.f32 %v225, %v280
    %v282 = vpop.f32.mrb[0].mxu0
    %v283 = vpop.f32.mrb[0].mxu0
    %v284 = vadd.f32 %v225, %v283
    %v285 = vpop.f32.mrb[0].mxu0
    %286 = vmatprep.mubr.bf16.mxu0 0
    %287 = vmatmul.mubr.bf16.gmra.mrb[0].mxu0 %v244
    %v288 = vpop.f32.mrb[0].mxu0
    %v289 = vadd.f32 %v225, %v288
    %v290 = vpop.f32.mrb[0].mxu0
    %v291 = vpop.f32.mrb[0].mxu0
    %v292 = vadd.f32 %v225, %v291
    %v293 = vpop.f32.mrb[0].mxu0
    %294 = vdwg.mxu0
    %v295 = vld [vmem:[%s0] sm:$0xff]
    %v296 = vld [vmem:[%s0 + $0x8] sm:$0xff]
    %v297 = vld [vmem:[%s0 + $0x10] sm:$0xff]
    %v298 = vld [vmem:[%s0 + $0x18] sm:$0xff]
    %v299 = vadd.f32 %v295, %v281
    %v300 = vadd.f32 %v296, %v284
    %v301 = vadd.f32 %v297, %v289
    %v302 = vadd.f32 %v298, %v292
    %v303 = vld [vmem:[%s3] sm:$0xff]
    %v304 = vld [vmem:[%s3 + $0x8] sm:$0xff]
    %v306 = vsel %vm51, %v303, 0
    %v309 = vsel %vm51, %v304, 0
    %311 = vmatprep.subr.mxu0 0.0
    %312 = vmatpush1.msra.mxu0 %v299
    %313 = vmatprep.subr.mxu0 0.0
    %314 = vmatpush1.msra.mxu0 %v300
    %315 = vmatprep.subr.mxu0 0.0
    %316 = vmatpush1.msra.mxu0 0.0
    %317 = vmatprep.subr.mxu0 0.0
    %318 = vmatpush1.msra.mxu0 0.0
    %319 = vmatprep.subr.mxu0 0.0
    %320 = vmatpush1.msra.mxu0 0.0
    %321 = vmatprep.subr.mxu0 0.0
    %322 = vmatpush1.msra.mxu0 0.0
    %323 = vmatprep.subr.mxu0 0.0
    %324 = vmatpush1.msra.mxu0 0.0
    %325 = vmatprep.subr.mxu0 0.0
    %326 = vmatpush1.msra.mxu0 0.0
    %327 = vmatprep.subr.mxu0 0.0
    %328 = vmatpush1.msra.mxu0 0.0
    %329 = vmatprep.subr.mxu0 0.0
    %330 = vmatpush1.msra.mxu0 0.0
    %331 = vmatprep.subr.mxu0 0.0
    %332 = vmatpush1.msra.mxu0 0.0
    %333 = vmatprep.subr.mxu0 0.0
    %334 = vmatpush1.msra.mxu0 0.0
    %335 = vmatprep.subr.mxu0 0.0
    %336 = vmatpush1.msra.mxu0 0.0
    %337 = vmatprep.subr.mxu0 0.0
    %338 = vmatpush1.msra.mxu0 0.0
    %339 = vmatprep.subr.mxu0 0.0
    %340 = vmatpush1.msra.mxu0 0.0
    %341 = vmatprep.subr.mxu0 0.0
    %342 = vmatpush1.msra.mxu0 0.0
    %343 = vmatprep.subr.mxu0 0.0
    %344 = vmatpush1.msra.mxu0 0.0
    %345 = vmatprep.subr.mxu0 0.0
    %346 = vmatpush1.msra.mxu0 0.0
    %347 = vmatprep.subr.mxu0 0.0
    %348 = vmatpush1.msra.mxu0 0.0
    %349 = vmatprep.subr.mxu0 0.0
    %350 = vmatpush1.msra.mxu0 0.0
    %351 = vmatprep.subr.mxu0 0.0
    %352 = vmatpush1.msra.mxu0 0.0
    %353 = vmatprep.subr.mxu0 0.0
    %354 = vmatpush1.msra.mxu0 0.0
    %355 = vmatprep.subr.mxu0 0.0
    %356 = vmatpush1.msra.mxu0 0.0
    %357 = vmatprep.subr.mxu0 0.0
    %358 = vmatpush1.msra.mxu0 0.0
    %359 = vmatprep.subr.mxu0 0.0
    %360 = vmatpush1.msra.mxu0 0.0
    %361 = vmatprep.subr.mxu0 0.0
    %362 = vmatpush1.msra.mxu0 0.0
    %363 = vmatprep.subr.mxu0 0.0
    %364 = vmatpush1.msra.mxu0 0.0
    %365 = vmatprep.subr.mxu0 0.0
    %366 = vmatpush1.msra.mxu0 0.0
    %367 = vmatprep.subr.mxu0 0.0
    %368 = vmatpush1.msra.mxu0 0.0
    %369 = vmatprep.subr.mxu0 0.0
    %370 = vmatpush1.msra.mxu0 0.0
    %371 = vmatprep.subr.mxu0 0.0
    %372 = vmatpush1.msra.mxu0 0.0
    %373 = vmatprep.subr.mxu0 0.0
    %374 = vmatpush1.msra.mxu0 0.0
    %375 = vmatprep.mubr.f32.mxu0 0.0
    %376 = vmatmul.mubr.f32.gmra.mrb[0].mxu0 %v306
    %v377 = vpop.f32.mrb[0].mxu0
    %v378 = vadd.f32 0.0, %v377
    %v379 = vpop.f32.mrb[0].mxu0
    %380 = vmatprep.mubr.f32.mxu0 0.0
    %381 = vmatmul.mubr.f32.gmra.mrb[0].mxu0 %v309
    %v382 = vpop.f32.mrb[0].mxu0
    %v383 = vadd.f32 0.0, %v382
    %v384 = vpop.f32.mrb[0].mxu0
    %385 = vdwg.mxu0
    %386 = vmatprep.subr.mxu0 0.0
    %387 = vmatpush1.msra.mxu0 %v301
    %388 = vmatprep.subr.mxu0 0.0
    %389 = vmatpush1.msra.mxu0 %v302
    %390 = vmatprep.subr.mxu0 0.0
    %391 = vmatpush1.msra.mxu0 0.0
    %392 = vmatprep.subr.mxu0 0.0
    %393 = vmatpush1.msra.mxu0 0.0
    %394 = vmatprep.subr.mxu0 0.0
    %395 = vmatpush1.msra.mxu0 0.0
    %396 = vmatprep.subr.mxu0 0.0
    %397 = vmatpush1.msra.mxu0 0.0
    %398 = vmatprep.subr.mxu0 0.0
    %399 = vmatpush1.msra.mxu0 0.0
    %400 = vmatprep.subr.mxu0 0.0
    %401 = vmatpush1.msra.mxu0 0.0
    %402 = vmatprep.subr.mxu0 0.0
    %403 = vmatpush1.msra.mxu0 0.0
    %404 = vmatprep.subr.mxu0 0.0
    %405 = vmatpush1.msra.mxu0 0.0
    %406 = vmatprep.subr.mxu0 0.0
    %407 = vmatpush1.msra.mxu0 0.0
    %408 = vmatprep.subr.mxu0 0.0
    %409 = vmatpush1.msra.mxu0 0.0
    %410 = vmatprep.subr.mxu0 0.0
    %411 = vmatpush1.msra.mxu0 0.0
    %412 = vmatprep.subr.mxu0 0.0
    %413 = vmatpush1.msra.mxu0 0.0
    %414 = vmatprep.subr.mxu0 0.0
    %415 = vmatpush1.msra.mxu0 0.0
    %416 = vmatprep.subr.mxu0 0.0
    %417 = vmatpush1.msra.mxu0 0.0
    %418 = vmatprep.subr.mxu0 0.0
    %419 = vmatpush1.msra.mxu0 0.0
    %420 = vmatprep.subr.mxu0 0.0
    %421 = vmatpush1.msra.mxu0 0.0
    %422 = vmatprep.subr.mxu0 0.0
    %423 = vmatpush1.msra.mxu0 0.0
    %424 = vmatprep.subr.mxu0 0.0
    %425 = vmatpush1.msra.mxu0 0.0
    %426 = vmatprep.subr.mxu0 0.0
    %427 = vmatpush1.msra.mxu0 0.0
    %428 = vmatprep.subr.mxu0 0.0
    %429 = vmatpush1.msra.mxu0 0.0
    %430 = vmatprep.subr.mxu0 0.0
    %431 = vmatpush1.msra.mxu0 0.0
    %432 = vmatprep.subr.mxu0 0.0
    %433 = vmatpush1.msra.mxu0 0.0
    %434 = vmatprep.subr.mxu0 0.0
    %435 = vmatpush1.msra.mxu0 0.0
    %436 = vmatprep.subr.mxu0 0.0
    %437 = vmatpush1.msra.mxu0 0.0
    %438 = vmatprep.subr.mxu0 0.0
    %439 = vmatpush1.msra.mxu0 0.0
    %440 = vmatprep.subr.mxu0 0.0
    %441 = vmatpush1.msra.mxu0 0.0
    %442 = vmatprep.subr.mxu0 0.0
    %443 = vmatpush1.msra.mxu0 0.0
    %444 = vmatprep.subr.mxu0 0.0
    %445 = vmatpush1.msra.mxu0 0.0
    %446 = vmatprep.subr.mxu0 0.0
    %447 = vmatpush1.msra.mxu0 0.0
    %448 = vmatprep.subr.mxu0 0.0
    %449 = vmatpush1.msra.mxu0 0.0
    %450 = vmatprep.mubr.f32.mxu0 0.0
    %451 = vmatmul.mubr.f32.gmra.mrb[0].mxu0 %v306
    %v452 = vpop.f32.mrb[0].mxu0
    %v453 = vadd.f32 0.0, %v452
    %v454 = vpop.f32.mrb[0].mxu0
    %455 = vmatprep.mubr.f32.mxu0 0.0
    %456 = vmatmul.mubr.f32.gmra.mrb[0].mxu0 %v309
    %v457 = vpop.f32.mrb[0].mxu0
    %v458 = vadd.f32 0.0, %v457
    %v459 = vpop.f32.mrb[0].mxu0
    %460 = vdwg.mxu0
    %v461 = vsub.f32 %v299, %v378
    %v462 = vsub.f32 %v300, %v383
    %v463 = vsub.f32 %v301, %v453
    %v464 = vsub.f32 %v302, %v458
    %v465 = vpack.c.bf16 %v462, %v461
    %v466 = vpack.c.bf16 %v464, %v463
    %v467 = vld [vmem:[%s7] sm:$0xf]
    %v468 = vld [vmem:[%s7 + $0x4] sm:$0xf]
    %v469 = vld [vmem:[%s7 + $0x8] sm:$0xf]
    %v470 = vld [vmem:[%s7 + $0xc] sm:$0xf]
    %v475 = vunpack.c.l.b16 %v467
    %v476 = vunpack.c.l.b16 %v468
    %v477 = vunpack.c.l.b16 %v469
    %v478 = vunpack.c.l.b16 %v470
    %v479 = vpack.c.b16 %v476, %v475
    %v480 = vpack.c.b16 %v478, %v477
    %v484 = vsel %vm239, %v465, 0
    %v487 = vsel %vm239, %v466, 0
    %489 = vmatprep.subr.bf16.mxu0 0
    %490 = vmatpush1.bf16.msra.mxu0 %v479
    %491 = vmatprep.subr.bf16.mxu0 0
    %492 = vmatpush1.bf16.msra.mxu0 %v480
    %493 = vmatprep.subr.bf16.mxu0 0
    %494 = vmatpush1.bf16.msra.mxu0 0
    %495 = vmatprep.subr.bf16.mxu0 0
    %496 = vmatpush1.bf16.msra.mxu0 0
    %497 = vmatprep.subr.bf16.mxu0 0
    %498 = vmatpush1.bf16.msra.mxu0 0
    %499 = vmatprep.subr.bf16.mxu0 0
    %500 = vmatpush1.bf16.msra.mxu0 0
    %501 = vmatprep.subr.bf16.mxu0 0
    %502 = vmatpush1.bf16.msra.mxu0 0
    %503 = vmatprep.subr.bf16.mxu0 0
    %504 = vmatpush1.bf16.msra.mxu0 0
    %505 = vmatprep.subr.bf16.mxu0 0
    %506 = vmatpush1.bf16.msra.mxu0 0
    %507 = vmatprep.subr.bf16.mxu0 0
    %508 = vmatpush1.bf16.msra.mxu0 0
    %509 = vmatprep.subr.bf16.mxu0 0
    %510 = vmatpush1.bf16.msra.mxu0 0
    %511 = vmatprep.subr.bf16.mxu0 0
    %512 = vmatpush1.bf16.msra.mxu0 0
    %513 = vmatprep.subr.bf16.mxu0 0
    %514 = vmatpush1.bf16.msra.mxu0 0
    %515 = vmatprep.subr.bf16.mxu0 0
    %516 = vmatpush1.bf16.msra.mxu0 0
    %517 = vmatprep.subr.bf16.mxu0 0
    %518 = vmatpush1.bf16.msra.mxu0 0
    %519 = vmatprep.subr.bf16.mxu0 0
    %520 = vmatpush1.bf16.msra.mxu0 0
    %521 = vmatprep.mubr.bf16.mxu0 0
    %522 = vmatmul.mubr.bf16.gmra.mrb[0].mxu0 %v484
    %v523 = vpop.f32.mrb[0].mxu0
    %v524 = vadd.f32 0.0, %v523
    %v525 = vpop.f32.mrb[0].mxu0
    %v526 = vpop.f32.mrb[0].mxu0
    %v527 = vadd.f32 0.0, %v526
    %v528 = vpop.f32.mrb[0].mxu0
    %529 = vmatprep.mubr.bf16.mxu0 0
    %530 = vmatmul.mubr.bf16.gmra.mrb[0].mxu0 %v487
    %v531 = vpop.f32.mrb[0].mxu0
    %v532 = vadd.f32 0.0, %v531
    %v533 = vpop.f32.mrb[0].mxu0
    %v534 = vpop.f32.mrb[0].mxu0
    %v535 = vadd.f32 0.0, %v534
    %v536 = vpop.f32.mrb[0].mxu0
    %537 = vdwg.mxu0
    %v538 = vmax.f32 %v524, 0.0
    %v539 = vmax.f32 %v527, 0.0
    %v540 = vmax.f32 %v532, 0.0
    %v541 = vmax.f32 %v535, 0.0
    %v542 = vpack.c.bf16 %v539, %v538
    %v543 = vpack.c.bf16 %v541, %v540
    %v544 = vld [vmem:[%s8] sm:$0xf]
    %v545 = vld [vmem:[%s8 + $0x4] sm:$0xf]
    %v546 = vld [vmem:[%s8 + $0x8] sm:$0xf]
    %v547 = vld [vmem:[%s8 + $0xc] sm:$0xf]
    %v548 = vld [vmem:[%s8 + $0x10] sm:$0xf]
    %v549 = vld [vmem:[%s8 + $0x14] sm:$0xf]
    %v550 = vld [vmem:[%s8 + $0x18] sm:$0xf]
    %v551 = vld [vmem:[%s8 + $0x1c] sm:$0xf]
    %v560 = vunpack.c.l.b16 %v544
    %v561 = vunpack.c.l.b16 %v545
    %v562 = vunpack.c.l.b16 %v546
    %v563 = vunpack.c.l.b16 %v547
    %v564 = vunpack.c.l.b16 %v548
    %v565 = vunpack.c.l.b16 %v549
    %v566 = vunpack.c.l.b16 %v550
    %v567 = vunpack.c.l.b16 %v551
    %v568 = vpack.c.b16 %v561, %v560
    %v569 = vpack.c.b16 %v563, %v562
    %v570 = vpack.c.b16 %v565, %v564
    %v571 = vpack.c.b16 %v567, %v566
    %vm576 = vcmask 523264
    %v578 = vsel %vm576, %v542, 0
    %v581 = vsel %vm576, %v543, 0
    %583 = vmatprep.subr.bf16.mxu0 0
    %584 = vmatpush1.bf16.msra.mxu0 %v568
    %585 = vmatprep.subr.bf16.mxu0 0
    %586 = vmatpush1.bf16.msra.mxu0 %v569
    %587 = vmatprep.subr.bf16.mxu0 0
    %588 = vmatpush1.bf16.msra.mxu0 %v570
    %589 = vmatprep.subr.bf16.mxu0 0
    %590 = vmatpush1.bf16.msra.mxu0 %v571
    %591 = vmatprep.subr.bf16.mxu0 0
    %592 = vmatpush1.bf16.msra.mxu0 0
    %593 = vmatprep.subr.bf16.mxu0 0
    %594 = vmatpush1.bf16.msra.mxu0 0
    %595 = vmatprep.subr.bf16.mxu0 0
    %596 = vmatpush1.bf16.msra.mxu0 0
    %597 = vmatprep.subr.bf16.mxu0 0
    %598 = vmatpush1.bf16.msra.mxu0 0
    %599 = vmatprep.subr.bf16.mxu0 0
    %600 = vmatpush1.bf16.msra.mxu0 0
    %601 = vmatprep.subr.bf16.mxu0 0
    %602 = vmatpush1.bf16.msra.mxu0 0
    %603 = vmatprep.subr.bf16.mxu0 0
    %604 = vmatpush1.bf16.msra.mxu0 0
    %605 = vmatprep.subr.bf16.mxu0 0
    %606 = vmatpush1.bf16.msra.mxu0 0
    %607 = vmatprep.subr.bf16.mxu0 0
    %608 = vmatpush1.bf16.msra.mxu0 0
    %609 = vmatprep.subr.bf16.mxu0 0
    %610 = vmatpush1.bf16.msra.mxu0 0
    %611 = vmatprep.subr.bf16.mxu0 0
    %612 = vmatpush1.bf16.msra.mxu0 0
    %613 = vmatprep.subr.bf16.mxu0 0
    %614 = vmatpush1.bf16.msra.mxu0 0
    %615 = vmatprep.mubr.bf16.mxu0 0
    %616 = vmatmul.mubr.bf16.gmra.mrb[0].mxu0 %v578
    %v617 = vpop.f32.mrb[0].mxu0
    %v618 = vadd.f32 0.0, %v617
    %v619 = vpop.f32.mrb[0].mxu0
    %v620 = vpop.f32.mrb[0].mxu0
    %v621 = vadd.f32 0.0, %v620
    %v622 = vpop.f32.mrb[0].mxu0
    %623 = vmatprep.mubr.bf16.mxu0 0
    %624 = vmatmul.mubr.bf16.gmra.mrb[0].mxu0 %v581
    %v625 = vpop.f32.mrb[0].mxu0
    %v626 = vadd.f32 0.0, %v625
    %v627 = vpop.f32.mrb[0].mxu0
    %v628 = vpop.f32.mrb[0].mxu0
    %v629 = vadd.f32 0.0, %v628
    %v630 = vpop.f32.mrb[0].mxu0
    %631 = vdwg.mxu0
    %v632 = vadd.f32 %v461, %v618
    %v633 = vadd.f32 %v462, %v621
    %v634 = vadd.f32 %v463, %v626
    %v635 = vadd.f32 %v464, %v629
    %636 = vmatprep.subr.mxu0 0.0
    %637 = vmatpush1.msra.mxu0 %v632
    %638 = vmatprep.subr.mxu0 0.0
    %639 = vmatpush1.msra.mxu0 %v633
    %640 = vmatprep.subr.mxu0 0.0
    %641 = vmatpush1.msra.mxu0 0.0
    %642 = vmatprep.subr.mxu0 0.0
    %643 = vmatpush1.msra.mxu0 0.0
    %644 = vmatprep.subr.mxu0 0.0
    %645 = vmatpush1.msra.mxu0 0.0
    %646 = vmatprep.subr.mxu0 0.0
    %647 = vmatpush1.msra.mxu0 0.0
    %648 = vmatprep.subr.mxu0 0.0
    %649 = vmatpush1.msra.mxu0 0.0
    %650 = vmatprep.subr.mxu0 0.0
    %651 = vmatpush1.msra.mxu0 0.0
    %652 = vmatprep.subr.mxu0 0.0
    %653 = vmatpush1.msra.mxu0 0.0
    %654 = vmatprep.subr.mxu0 0.0
    %655 = vmatpush1.msra.mxu0 0.0
    %656 = vmatprep.subr.mxu0 0.0
    %657 = vmatpush1.msra.mxu0 0.0
    %658 = vmatprep.subr.mxu0 0.0
    %659 = vmatpush1.msra.mxu0 0.0
    %660 = vmatprep.subr.mxu0 0.0
    %661 = vmatpush1.msra.mxu0 0.0
    %662 = vmatprep.subr.mxu0 0.0
    %663 = vmatpush1.msra.mxu0 0.0
    %664 = vmatprep.subr.mxu0 0.0
    %665 = vmatpush1.msra.mxu0 0.0
    %666 = vmatprep.subr.mxu0 0.0
    %667 = vmatpush1.msra.mxu0 0.0
    %668 = vmatprep.subr.mxu0 0.0
    %669 = vmatpush1.msra.mxu0 0.0
    %670 = vmatprep.subr.mxu0 0.0
    %671 = vmatpush1.msra.mxu0 0.0
    %672 = vmatprep.subr.mxu0 0.0
    %673 = vmatpush1.msra.mxu0 0.0
    %674 = vmatprep.subr.mxu0 0.0
    %675 = vmatpush1.msra.mxu0 0.0
    %676 = vmatprep.subr.mxu0 0.0
    %677 = vmatpush1.msra.mxu0 0.0
    %678 = vmatprep.subr.mxu0 0.0
    %679 = vmatpush1.msra.mxu0 0.0
    %680 = vmatprep.subr.mxu0 0.0
    %681 = vmatpush1.msra.mxu0 0.0
    %682 = vmatprep.subr.mxu0 0.0
    %683 = vmatpush1.msra.mxu0 0.0
    %684 = vmatprep.subr.mxu0 0.0
    %685 = vmatpush1.msra.mxu0 0.0
    %686 = vmatprep.subr.mxu0 0.0
    %687 = vmatpush1.msra.mxu0 0.0
    %688 = vmatprep.subr.mxu0 0.0
    %689 = vmatpush1.msra.mxu0 0.0
    %690 = vmatprep.subr.mxu0 0.0
    %691 = vmatpush1.msra.mxu0 0.0
    %692 = vmatprep.subr.mxu0 0.0
    %693 = vmatpush1.msra.mxu0 0.0
    %694 = vmatprep.subr.mxu0 0.0
    %695 = vmatpush1.msra.mxu0 0.0
    %696 = vmatprep.subr.mxu0 0.0
    %697 = vmatpush1.msra.mxu0 0.0
    %698 = vmatprep.subr.mxu0 0.0
    %699 = vmatpush1.msra.mxu0 0.0
    %700 = vmatprep.mubr.f32.mxu0 0.0
    %701 = vmatmul.mubr.f32.gmra.mrb[0].mxu0 %v306
    %v702 = vpop.f32.mrb[0].mxu0
    %v703 = vadd.f32 0.0, %v702
    %v704 = vpop.f32.mrb[0].mxu0
    %705 = vmatprep.mubr.f32.mxu0 0.0
    %706 = vmatmul.mubr.f32.gmra.mrb[0].mxu0 %v309
    %v707 = vpop.f32.mrb[0].mxu0
    %v708 = vadd.f32 0.0, %v707
    %v709 = vpop.f32.mrb[0].mxu0
    %710 = vdwg.mxu0
    %711 = vmatprep.subr.mxu0 0.0
    %712 = vmatpush1.msra.mxu0 %v634
    %713 = vmatprep.subr.mxu0 0.0
    %714 = vmatpush1.msra.mxu0 %v635
    %715 = vmatprep.subr.mxu0 0.0
    %716 = vmatpush1.msra.mxu0 0.0
    %717 = vmatprep.subr.mxu0 0.0
    %718 = vmatpush1.msra.mxu0 0.0
    %719 = vmatprep.subr.mxu0 0.0
    %720 = vmatpush1.msra.mxu0 0.0
    %721 = vmatprep.subr.mxu0 0.0
    %722 = vmatpush1.msra.mxu0 0.0
    %723 = vmatprep.subr.mxu0 0.0
    %724 = vmatpush1.msra.mxu0 0.0
    %725 = vmatprep.subr.mxu0 0.0
    %726 = vmatpush1.msra.mxu0 0.0
    %727 = vmatprep.subr.mxu0 0.0
    %728 = vmatpush1.msra.mxu0 0.0
    %729 = vmatprep.subr.mxu0 0.0
    %730 = vmatpush1.msra.mxu0 0.0
    %731 = vmatprep.subr.mxu0 0.0
    %732 = vmatpush1.msra.mxu0 0.0
    %733 = vmatprep.subr.mxu0 0.0
    %734 = vmatpush1.msra.mxu0 0.0
    %735 = vmatprep.subr.mxu0 0.0
    %736 = vmatpush1.msra.mxu0 0.0
    %737 = vmatprep.subr.mxu0 0.0
    %738 = vmatpush1.msra.mxu0 0.0
    %739 = vmatprep.subr.mxu0 0.0
    %740 = vmatpush1.msra.mxu0 0.0
    %741 = vmatprep.subr.mxu0 0.0
    %742 = vmatpush1.msra.mxu0 0.0
    %743 = vmatprep.subr.mxu0 0.0
    %744 = vmatpush1.msra.mxu0 0.0
    %745 = vmatprep.subr.mxu0 0.0
    %746 = vmatpush1.msra.mxu0 0.0
    %747 = vmatprep.subr.mxu0 0.0
    %748 = vmatpush1.msra.mxu0 0.0
    %749 = vmatprep.subr.mxu0 0.0
    %750 = vmatpush1.msra.mxu0 0.0
    %751 = vmatprep.subr.mxu0 0.0
    %752 = vmatpush1.msra.mxu0 0.0
    %753 = vmatprep.subr.mxu0 0.0
    %754 = vmatpush1.msra.mxu0 0.0
    %755 = vmatprep.subr.mxu0 0.0
    %756 = vmatpush1.msra.mxu0 0.0
    %757 = vmatprep.subr.mxu0 0.0
    %758 = vmatpush1.msra.mxu0 0.0
    %759 = vmatprep.subr.mxu0 0.0
    %760 = vmatpush1.msra.mxu0 0.0
    %761 = vmatprep.subr.mxu0 0.0
    %762 = vmatpush1.msra.mxu0 0.0
    %763 = vmatprep.subr.mxu0 0.0
    %764 = vmatpush1.msra.mxu0 0.0
    %765 = vmatprep.subr.mxu0 0.0
    %766 = vmatpush1.msra.mxu0 0.0
    %767 = vmatprep.subr.mxu0 0.0
    %768 = vmatpush1.msra.mxu0 0.0
    %769 = vmatprep.subr.mxu0 0.0
    %770 = vmatpush1.msra.mxu0 0.0
    %771 = vmatprep.subr.mxu0 0.0
    %772 = vmatpush1.msra.mxu0 0.0
    %773 = vmatprep.subr.mxu0 0.0
    %774 = vmatpush1.msra.mxu0 0.0
    %775 = vmatprep.mubr.f32.mxu0 0.0
    %776 = vmatmul.mubr.f32.gmra.mrb[0].mxu0 %v306
    %v777 = vpop.f32.mrb[0].mxu0
    %v778 = vadd.f32 0.0, %v777
    %v779 = vpop.f32.mrb[0].mxu0
    %780 = vmatprep.mubr.f32.mxu0 0.0
    %781 = vmatmul.mubr.f32.gmra.mrb[0].mxu0 %v309
    %v782 = vpop.f32.mrb[0].mxu0
    %v783 = vadd.f32 0.0, %v782
    %v784 = vpop.f32.mrb[0].mxu0
    %785 = vdwg.mxu0
    %v786 = vsub.f32 %v632, %v703
    %v787 = vsub.f32 %v633, %v708
    %v788 = vsub.f32 %v634, %v778
    %v789 = vsub.f32 %v635, %v783
    %v790 = vsel %vm239, %v786, 0.0
    %791 = vadd.xlane.f32.xlu0 %v790
    %v792 = vpop.xlane.xlu0 %791
    %v793 = vsel %vm239, %v787, 0.0
    %794 = vadd.xlane.f32.xlu0 %v793
    %v795 = vpop.xlane.xlu0 %794
    %v796 = vsel %vm239, %v788, 0.0
    %797 = vadd.xlane.f32.xlu0 %v796
    %v798 = vpop.xlane.xlu0 %797
    %v799 = vsel %vm239, %v789, 0.0
    %800 = vadd.xlane.f32.xlu0 %v799
    %v801 = vpop.xlane.xlu0 %800
    %v802 = vrcp.pop 32.0
    %v803 = vmul.f32 %v792, %v802
    %v804 = vmul.f32 %v795, %v802
    %v805 = vmul.f32 %v798, %v802
    %v806 = vmul.f32 %v801, %v802
    %v807 = vsub.f32 %v786, %v803
    %v808 = vsub.f32 %v787, %v804
    %v809 = vsub.f32 %v788, %v805
    %v810 = vsub.f32 %v789, %v806
    %v811 = vmul.f32 %v807, %v807
    %v812 = vmul.f32 %v808, %v808
    %v813 = vmul.f32 %v809, %v809
    %v814 = vmul.f32 %v810, %v810
    %v815 = vsel %vm239, %v811, 0.0
    %816 = vadd.xlane.f32.xlu0 %v815
    %v817 = vpop.xlane.xlu0 %816
    %v818 = vsel %vm239, %v812, 0.0
    %819 = vadd.xlane.f32.xlu0 %v818
    %v820 = vpop.xlane.xlu0 %819
    %v821 = vsel %vm239, %v813, 0.0
    %822 = vadd.xlane.f32.xlu0 %v821
    %v823 = vpop.xlane.xlu0 %822
    %v824 = vsel %vm239, %v814, 0.0
    %825 = vadd.xlane.f32.xlu0 %v824
    %v826 = vpop.xlane.xlu0 %825
    %v827 = vmul.f32 %v817, %v802
    %v828 = vmul.f32 %v820, %v802
    %v829 = vmul.f32 %v823, %v802
    %v830 = vmul.f32 %v826, %v802
    %v831 = vadd.f32 %v827, 1e-05
    %v832 = vadd.f32 %v828, 1e-05
    %v833 = vadd.f32 %v829, 1e-05
    %v834 = vadd.f32 %v830, 1e-05
    %v835 = vrsqrt.pop %v831
    %v836 = vrsqrt.pop %v832
    %v837 = vrsqrt.pop %v833
    %v838 = vrsqrt.pop %v834
    %v839 = vmul.f32 %v807, %v835
    %v840 = vmul.f32 %v808, %v836
    %v841 = vmul.f32 %v809, %v837
    %v842 = vmul.f32 %v810, %v838
    %v843 = vld [vmem:[%s9] sm:$0x1]
    %v845 = vlaneseq
    %v846 = vshrl.u32 %v845, 7
    %v847 = vsub.s32 0, %v846
    %v848 = vrot.slane %v843, %v847
    %v850 = vmul.f32 %v839, %v848
    %v851 = vmul.f32 %v840, %v848
    %v852 = vmul.f32 %v841, %v848
    %v853 = vmul.f32 %v842, %v848
    %v854 = vld [vmem:[%s10] sm:$0x1]
    %v856 = vlaneseq
    %v857 = vshrl.u32 %v856, 7
    %v858 = vsub.s32 0, %v857
    %v859 = vrot.slane %v854, %v858
    %v861 = vadd.f32 %v850, %v859
    %v862 = vadd.f32 %v851, %v859
    %v863 = vadd.f32 %v852, %v859
    %v864 = vadd.f32 %v853, %v859
    %v865 = vsel %vm239, %v861, 0.0
    %v866 = vsel %vm239, %v862, 0.0
    %v867 = vadd.f32 %v865, %v866
    %v868 = vrot.slane %v867, 4
    %v869 = vadd.f32 %v867, %v868
    %v870 = vrot.slane %v869, 2
    %v871 = vadd.f32 %v869, %v870
    %v872 = vrot.slane %v871, 1
    %v873 = vadd.f32 %v871, %v872
    %v874 = vsel %vm239, %v863, 0.0
    %v875 = vsel %vm239, %v864, 0.0
    %v876 = vadd.f32 %v874, %v875
    %v877 = vrot.slane %v876, 4
    %v878 = vadd.f32 %v876, %v877
    %v879 = vrot.slane %v878, 2
    %v880 = vadd.f32 %v878, %v879
    %v881 = vrot.slane %v880, 1
    %v882 = vadd.f32 %v880, %v881
    %v883 = vrcp.pop 16.0
    %v884 = vmul.f32 %v873, %v883
    %v885 = vmul.f32 %v882, %v883
    %v886 = vsub.f32 %v861, %v884
    %v887 = vsub.f32 %v862, %v884
    %v888 = vsub.f32 %v863, %v885
    %v889 = vsub.f32 %v864, %v885
    %890 = vst.msk [vmem:[#allocation2] sm:$0xff] %vm239, %v886
    %891 = vst.msk [vmem:[#allocation2 + $0x8] sm:$0xff] %vm239, %v887
    %892 = vst.msk [vmem:[#allocation2 + $0x10] sm:$0xff] %vm239, %v888
    %893 = vst.msk [vmem:[#allocation2 + $0x18] sm:$0xff] %vm239, %v889
    %v894 = vld [vmem:[%s4] sm:$0xff]
    %v895 = vld [vmem:[%s4 + $0x8] sm:$0xff]
    %v896 = vld [vmem:[%s4 + $0x10] sm:$0xff]
    %v897 = vld [vmem:[%s4 + $0x18] sm:$0xff]
    %v898 = vadd.f32 %v894, %v378
    %v899 = vadd.f32 %v895, %v383
    %v900 = vadd.f32 %v896, %v453
    %v901 = vadd.f32 %v897, %v458
    %v902 = vadd.f32 %v898, %v703
    %v903 = vadd.f32 %v899, %v708
    %v904 = vadd.f32 %v900, %v778
    %v905 = vadd.f32 %v901, %v783
    %906 = vst.msk [vmem:[#allocation4] sm:$0xff] %vm239, %v902
    %907 = vst.msk [vmem:[#allocation4 + $0x8] sm:$0xff] %vm239, %v903
    %908 = vst.msk [vmem:[#allocation4 + $0x10] sm:$0xff] %vm239, %v904
    %909 = vst.msk [vmem:[#allocation4 + $0x18] sm:$0xff] %vm239, %v905
    // Predicated region
    $region46: #{_lambda_.9} parent=1 // pred_check
      _
    $region47: #{_lambda_.9} parent=1 // pred_check_branch
      %911 = sbr.rel (0) target = $region49
    $region48: #{_lambda_.9} parent=1 // pred_region
      %s913 = ssub.s32 512, 512
      %914 = vsyncadd [#allocation3], %s913
      %s915 = sshll.u32 [#allocation2], 4
      %s916 = int_to_ptr.vmem [resolvable:$true] %s915
      %921 = dma.vmem_to_hbm [thread:$0]  %s916, 512, %s11, [#allocation3], 128, 128, 8
    $region49: #{_lambda_.9} parent=1 // pred_fallthru
      _
    // Predicated region
    $region50: #{_lambda_.9} parent=1 // pred_check
      _
    $region51: #{_lambda_.9} parent=1 // pred_check_branch
      %923 = sbr.rel (0) target = $region53
    $region52: #{_lambda_.9} parent=1 // pred_region
      %s925 = ssub.s32 512, 512
      %926 = vsyncadd [#allocation5], %s925
      %s927 = sshll.u32 [#allocation4], 4
      %s928 = int_to_ptr.vmem [resolvable:$true] %s927
      %933 = dma.vmem_to_hbm [thread:$0]  %s928, 512, %s12, [#allocation5], 128, 128, 8
    $region53: #{_lambda_.9} parent=1 // pred_fallthru
      _
    // Predicated region
    $region54: #{_lambda_.9} parent=1 // pred_check
      _
    $region55: #{_lambda_.9} parent=1 // pred_check_branch
      %935 = sbr.rel (0) target = $region57
    $region56: #{_lambda_.9} parent=1 // pred_region
      %936 = dma.done [#allocation3], 512
    $region57: #{_lambda_.9} parent=1 // pred_fallthru
      _
    // Predicated region
    $region58: #{_lambda_.9} parent=1 // pred_check
      _
    $region59: #{_lambda_.9} parent=1 // pred_check_branch
      %938 = sbr.rel (0) target = $region61
    $region60: #{_lambda_.9} parent=1 // pred_region
      %939 = dma.done [#allocation5], 512
    $region61: #{_lambda_.9} parent=1 // pred_fallthru
      _
    %940 = vsyncpa [#allocation3], 1
    %941 = vsyncpa [#allocation5], 1

</llo_original>
